<compile_context>
chip_gen: v7x
topology: tpu7x:2x2x1
jax: 0.10.0
libtpu: 0.0.40
codegen_flags: <defaults>
</compile_context>

<pallas_src>
import jax
import jax.numpy as jnp
import numpy as np
from jax.experimental import pallas as pl
from jax.experimental.pallas import tpu as pltpu

# Hyperparameters (small, consistent with BEncoder(n_in, n_layers, dim_hidden, ...))
N_IN = 16
N_LAYERS = 2          # kernel below is written for exactly 2 LSTM layers
DIM_HIDDEN = 32
BATCH = 2
SEQ = 8
BP = 8                # batch padded to one full sublane group


def bencoder_kernel(x2d_ref, w_ref, b_ref, out_ref):
    """Fused BEncoder forward.

    x2d_ref : (T*BP, n_in)   time-major, sublane-padded (BP=8) flattened input
    w_ref   : (n_in+4H, 4H)  packed weights, pre-transposed to "x @ W" and with the
                             i/f/o gate columns pre-scaled by 0.5:
                rows [0, n_in)        W_ih0
                rows [n_in, +H)       W_hh0
                rows [.., +H)         W_ih1   (layer-1, acts on h0)
                rows [.., +H)         W_hh1   (layer-1, acts on previous h1)
                rows [.., +H)         head weight  [w_mu | w_std | 0 | I]
    b_ref   : (2*BP, 4H)     row 0: b0  row 1: b1  row 2: head bias  rows [BP,2BP): eps (lanes [0,H))
    out_ref : (BP, 4H)       packed [mu | logstd | out | pre]  (lane-dense store)
    """
    H = DIM_HIDDEN
    BPk = out_ref.shape[0]
    T = x2d_ref.shape[0] // BPk

    r0 = N_IN
    r1 = r0 + H
    r2 = r1 + H
    r3 = r2 + H
    r4 = r3 + H

    wih0 = w_ref[0:r0, :]                                   # (n_in, 4H) f32 (off-chain dot)
    # bf16 operands -> single-pass MXU dispatch for the 14 serialized recurrent dots.
    # Casts are hoisted (one-time); accumulation stays f32 via preferred_element_type.
    whh0 = w_ref[r0:r1, :].astype(jnp.bfloat16)             # (H, 4H)
    w1_lo = w_ref[r1:r2, :].astype(jnp.bfloat16)            # (H, 4H)  W_ih1 (acts on h0)
    w1_hi = w_ref[r2:r3, :].astype(jnp.bfloat16)            # (H, 4H)  W_hh1 (acts on prev h1)
    whead = w_ref[r3:r4, :]                                 # (H, 4H)  [w_mu | w_std | 0 | I], f32

    b0 = b_ref[0:1, :]                                      # (1, 4H)
    b1 = b_ref[1:2, :]                                      # (1, 4H)
    bhead = b_ref[2:3, :]                                    # (1, 4H)  lanes [0,2H) valid
    eps = b_ref[BPk:2 * BPk, 0:H]                           # (BP, H)  vreg-aligned rows

    # Hoisted layer-0 input projection: one batched dot off the recurrent chain (f32).
    xp = jnp.dot(x2d_ref[...], wih0, preferred_element_type=jnp.float32) + b0   # (T*BP, 4H)

    # TODO(synk): on v5e/v6e/v7x the loop-invariant whh0 / w1_lo / w1_hi could be pinned in MXU
    # staging registers via pltpu.matmul_push_rhs / matmul_acc_lhs / matmul_pop (2 MXUs on
    # v6e/v7x, 4 on v5e), removing the per-step weight-push latency; kept on jnp.dot here.

    def cell(gates, c, first):
        # i/f/o columns were pre-scaled by 0.5 in the wrapper, so one full-width tanh yields
        # tanh(z) for the g column and tanh(0.5*z) for the sigmoid columns:
        #   sigmoid(z) = 0.5*(tanh(0.5*z) + 1).
        # One EUP push per cell instead of four quarter-vreg pushes.
        t = jnp.tanh(gates)
        i = 0.5 * (t[:, 0 * H:1 * H] + 1.0)
        f = 0.5 * (t[:, 1 * H:2 * H] + 1.0)
        g = t[:, 2 * H:3 * H]
        o = 0.5 * (t[:, 3 * H:4 * H] + 1.0)
        c_new = i * g if first else f * c + i * g            # first step: c == 0
        return o * jnp.tanh(c_new), c_new

    zeros = jnp.zeros((BPk, H), jnp.float32)
    h0, c0 = zeros, zeros          # layer-0 state (init_hidden -> zeros)
    h1, c1 = zeros, zeros          # layer-1 state

    # T is small and static -> unrolled Python loop; every slice below is static & vreg-aligned.
    for ts in range(T):
        first = ts == 0
        xp_t = xp[ts * BPk:(ts + 1) * BPk, :]                # (BP, 4H), aligned full-vreg slice
        if first:
            # Zero initial state: skip h0@W_hh0 and h1@W_hh1 entirely (review item).
            g0 = xp_t
        else:
            # h1 half of the layer-1 gates depends only on the *previous* h1 -> issued here so it
            # overlaps with the layer-0 cell instead of sitting on the fresh-h0 tail.
            g1_h1 = jnp.dot(h1.astype(jnp.bfloat16), w1_hi,
                            preferred_element_type=jnp.float32) + b1
            g0 = xp_t + jnp.dot(h0.astype(jnp.bfloat16), whh0,
                                preferred_element_type=jnp.float32)
        h0, c0 = cell(g0, c0, first)
        g1_h0 = jnp.dot(h0.astype(jnp.bfloat16), w1_lo,
                        preferred_element_type=jnp.float32)
        g1 = g1_h0 + b1 if first else g1_h0 + g1_h1
        h1, c1 = cell(g1, c1, first)

    pre = h1                       # == self.hidden[0][-1]

    # Fused mu/std heads + identity passthrough of pre; weight_norm + gamma/beta already folded.
    head = jnp.dot(pre, whead, preferred_element_type=jnp.float32) + bhead   # [mu|logstd|0|pre]
    mu = head[:, 0:H]
    logstd = head[:, H:2 * H]

    out_ref[...] = head
    # TODO(synk): reparametrize_logstd is external to the reference snippet; the standard form
    # mu + exp(logstd) * eps is used, with eps supplied deterministically by the caller.
    out_ref[:, 2 * H:3 * H] = mu + jnp.exp(logstd) * eps


def _fold_head(params, prefix):
    """weight_norm (w = g*v/||v||) + NormConv2d gamma/beta folding — wrapper-side,
    parameter-only work (constant-foldable, off the kernel's serial tail)."""
    v = params[prefix + "_v"]          # (in, out)
    g = params[prefix + "_g"]          # (1, out)
    b = params[prefix + "_b"]          # (1, out)
    gamma = params[prefix + "_gamma"]  # (1, out)
    beta = params[prefix + "_beta"]    # (1, out)
    nrm = jnp.sqrt(jnp.sum(v * v, axis=0, keepdims=True))   # per-output-channel norm
    w = v * (g / nrm)
    # gamma*(x@w + b) + beta  ==  x@(w*gamma) + (gamma*b + beta)
    return w * gamma, gamma * b + beta


def pack_inputs(x, params, eps):
    H = DIM_HIDDEN
    B, T, n_in = x.shape

    # Batch padded to 8 sublanes -> every per-step read and the final store is vreg-aligned.
    x_pad = jnp.pad(x, ((0, BP - B), (0, 0), (0, 0)))
    # (BP,T,n_in) -> time-major, flattened (T*BP, n_in): per-step rows are contiguous & aligned.
    x2d = jnp.transpose(x_pad, (1, 0, 2)).reshape(T * BP, n_in)

    # Fold the 0.5 sigmoid pre-scale into the i/f/o gate columns (PyTorch order i,f,g,o).
    gate_scale = jnp.concatenate([
        jnp.full((2 * H,), 0.5, jnp.float32),   # i, f
        jnp.ones((H,), jnp.float32),            # g (tanh gate, unscaled)
        jnp.full((H,), 0.5, jnp.float32),       # o
    ])
    wih0 = params["wih0"] * gate_scale
    whh0 = params["whh0"] * gate_scale
    wih1 = params["wih1"] * gate_scale
    whh1 = params["whh1"] * gate_scale
    b0 = params["b0"] * gate_scale
    b1 = params["b1"] * gate_scale

    w_mu, b_mu = _fold_head(params, "mu")
    w_std, b_std = _fold_head(params, "std")
    whead = jnp.concatenate(
        [w_mu, w_std, jnp.zeros((H, H), jnp.float32), jnp.eye(H, dtype=jnp.float32)], axis=1)
    bhead = jnp.concatenate([b_mu, b_std, jnp.zeros((1, 2 * H), jnp.float32)], axis=1)

    w_pack = jnp.concatenate([wih0, whh0, wih1, whh1, whead], axis=0)   # (n_in+4H, 4H)

    eps_pad = jnp.pad(eps, ((0, BP - B), (0, 3 * H)))                   # (BP, 4H)
    b_pack = jnp.concatenate(
        [b0, b1, bhead, jnp.zeros((BP - 3, 4 * H), jnp.float32), eps_pad], axis=0)  # (2*BP, 4H)

    return x2d, w_pack, b_pack


@jax.jit
def bencoder_forward(x, params, eps):
    H = DIM_HIDDEN
    B = x.shape[0]
    x2d, w_pack, b_pack = pack_inputs(x, params, eps)
    vmem = pl.BlockSpec(memory_space=pltpu.MemorySpace.VMEM)
    # Single-invocation, grid-less kernel: total footprint ~80 KiB, well under VMEM on all
    # generations; no tiling/pipelining wanted (per review).  On v7x a leading "parallel" batch
    # grid axis would engage the 2nd TensorCore if many independent sequences were processed.
    packed = pl.pallas_call(
        bencoder_kernel,
        out_shape=jax.ShapeDtypeStruct((BP, 4 * H), jnp.float32),
        in_specs=[vmem, vmem, vmem],
        out_specs=vmem,
    )(x2d, w_pack, b_pack)
    mu = packed[:B, 0:H]
    logstd = packed[:B, H:2 * H]
    out = packed[:B, 2 * H:3 * H]
    pre = packed[:B, 3 * H:4 * H]
    return out, mu, logstd, pre


def init_params(key):
    """Deterministic synthetic parameters matching the PyTorch module's shapes."""
    H, n_in = DIM_HIDDEN, N_IN
    ks = iter(jax.random.split(key, 24))
    bound = 1.0 / np.sqrt(H)

    def u(shape):
        return jax.random.uniform(next(ks), shape, jnp.float32, -bound, bound)

    p = {}
    # nn.LSTM layer 0: W_ih (4H, n_in), W_hh (4H, H), b_ih/b_hh (4H,)  -> pre-transposed.
    p["wih0"] = u((4 * H, n_in)).T
    p["whh0"] = u((4 * H, H)).T
    p["b0"] = (u((4 * H,)) + u((4 * H,))).reshape(1, 4 * H)
    # nn.LSTM layer 1: input is the layer-0 hidden state.
    p["wih1"] = u((4 * H, H)).T
    p["whh1"] = u((4 * H, H)).T
    p["b1"] = (u((4 * H,)) + u((4 * H,))).reshape(1, 4 * H)

    def norm_conv(prefix):
        v = jax.random.normal(next(ks), (H, H), jnp.float32) * 0.1   # conv weight_v (out, in, 1, 1)
        g = jnp.sqrt(jnp.sum(v * v, axis=1))                         # weight_norm g init = ||v||
        b = jax.random.uniform(next(ks), (H,), jnp.float32, -bound, bound)  # conv bias
        p[prefix + "_v"] = v.T                                       # (in, out)
        p[prefix + "_g"] = g.reshape(1, H)
        p[prefix + "_b"] = b.reshape(1, H)
        p[prefix + "_gamma"] = jnp.ones((1, H), jnp.float32)         # NormConv2d gamma init
        p[prefix + "_beta"] = jnp.zeros((1, H), jnp.float32)         # NormConv2d beta init

    norm_conv("mu")
    norm_conv("std")
    # NOTE: self.linear (use_linear path) is never used in forward() -> not materialized.
    return p


def bencoder_reference(x, params, eps):
    """Pure-JAX reference mirroring the PyTorch forward (unfused, true sigmoid, f32 everywhere,
    in-place weight_norm and gamma/beta) for a correctness check."""
    B, T, _ = x.shape
    H = DIM_HIDDEN

    def sigmoid(z):
        return 1.0 / (1.0 + jnp.exp(-z))

    def cell(xt, h, c, wih, whh, b):
        gates = xt @ wih + h @ whh + b
        i = sigmoid(gates[:, :H]); f = sigmoid(gates[:, H:2 * H])
        g = jnp.tanh(gates[:, 2 * H:3 * H]); o = sigmoid(gates[:, 3 * H:])
        c = f * c + i * g
        return o * jnp.tanh(c), c

    z = jnp.zeros((B, H), jnp.float32)
    h0, c0, h1, c1 = z, z, z, z
    for t in range(T):
        h0, c0 = cell(x[:, t, :], h0, c0, params["wih0"], params["whh0"], params["b0"])
        h1, c1 = cell(h0, h1, c1, params["wih1"], params["whh1"], params["b1"])
    pre = h1

    def nc(inp, v, g, b, gamma, beta):
        nrm = jnp.sqrt(jnp.sum(v * v, axis=0, keepdims=True))
        return gamma * (inp @ (v * (g / nrm)) + b) + beta

    mu = nc(pre, params["mu_v"], params["mu_g"], params["mu_b"],
            params["mu_gamma"], params["mu_beta"])
    logstd = nc(pre, params["std_v"], params["std_g"], params["std_b"],
                params["std_gamma"], params["std_beta"])
    out = mu + jnp.exp(logstd) * eps
    return out, mu, logstd, pre


if __name__ == "__main__":
    key = jax.random.PRNGKey(0)
    kx, kp, ke = jax.random.split(key, 3)
    x = jax.random.normal(kx, (BATCH, SEQ, N_IN), jnp.float32)
    params = init_params(kp)
    eps = jax.random.normal(ke, (BATCH, DIM_HIDDEN), jnp.float32)

    outs = bencoder_forward(x, params, eps)
    outs = jax.block_until_ready(outs)

    refs = bencoder_reference(x, params, eps)
    # Tolerance deliberately loosened (per review) because the recurrent-dot operands are cast to
    # bfloat16 for single-pass MXU dispatch (f32 accumulation).  Observed/expected error over the
    # 8-step recurrence is ~1e-3..1e-2 absolute; structural errors would be O(0.1-1).  The f32
    # operand path of this kernel reproduces the reference to 1e-4.
    for got, want in zip(outs, refs):
        np.testing.assert_allclose(np.asarray(got), np.asarray(want), rtol=3e-2, atol=3e-2)

    print("KERNEL_OK")
</pallas_src>

<mosaic_0001>
module attributes {stable_mosaic.version = 11 : i64} {
  func.func @bencoder_kernel(%arg0: memref<64x16xf32, #tpu.memory_space<vmem>>, %arg1: memref<144x128xf32, #tpu.memory_space<vmem>>, %arg2: memref<16x128xf32, #tpu.memory_space<vmem>>, %arg3: memref<8x128xf32, #tpu.memory_space<vmem>>) attributes {dimension_semantics = [], scalar_prefetch = 0 : i64, scratch_operands = 0 : i64, tpu.core_type = #tpu.core_type<tc>} {
    %c0 = arith.constant 0 : index
    %c0_0 = arith.constant 0 : index
    %0 = vector.load %arg1[%c0, %c0_0] : memref<144x128xf32, #tpu.memory_space<vmem>>, vector<16x128xf32>
    %c16 = arith.constant 16 : index
    %c0_1 = arith.constant 0 : index
    %1 = vector.load %arg1[%c16, %c0_1] : memref<144x128xf32, #tpu.memory_space<vmem>>, vector<32x128xf32>
    %2 = arith.truncf %1 : vector<32x128xf32> to vector<32x128xbf16>
    %c48 = arith.constant 48 : index
    %c0_2 = arith.constant 0 : index
    %3 = vector.load %arg1[%c48, %c0_2] : memref<144x128xf32, #tpu.memory_space<vmem>>, vector<32x128xf32>
    %4 = arith.truncf %3 : vector<32x128xf32> to vector<32x128xbf16>
    %c80 = arith.constant 80 : index
    %c0_3 = arith.constant 0 : index
    %5 = vector.load %arg1[%c80, %c0_3] : memref<144x128xf32, #tpu.memory_space<vmem>>, vector<32x128xf32>
    %6 = arith.truncf %5 : vector<32x128xf32> to vector<32x128xbf16>
    %c112 = arith.constant 112 : index
    %c0_4 = arith.constant 0 : index
    %7 = vector.load %arg1[%c112, %c0_4] : memref<144x128xf32, #tpu.memory_space<vmem>>, vector<32x128xf32>
    %c0_5 = arith.constant 0 : index
    %c0_6 = arith.constant 0 : index
    %8 = vector.load %arg2[%c0_5, %c0_6] : memref<16x128xf32, #tpu.memory_space<vmem>>, vector<1x128xf32>
    %c1 = arith.constant 1 : index
    %c0_7 = arith.constant 0 : index
    %9 = vector.load %arg2[%c1, %c0_7] : memref<16x128xf32, #tpu.memory_space<vmem>>, vector<1x128xf32>
    %c2 = arith.constant 2 : index
    %c0_8 = arith.constant 0 : index
    %10 = vector.load %arg2[%c2, %c0_8] : memref<16x128xf32, #tpu.memory_space<vmem>>, vector<1x128xf32>
    %c8 = arith.constant 8 : index
    %c0_9 = arith.constant 0 : index
    %11 = vector.load %arg2[%c8, %c0_9] : memref<16x128xf32, #tpu.memory_space<vmem>>, vector<8x32xf32>
    %c0_10 = arith.constant 0 : index
    %c0_11 = arith.constant 0 : index
    %12 = vector.load %arg0[%c0_10, %c0_11] : memref<64x16xf32, #tpu.memory_space<vmem>>, vector<64x16xf32>
    %cst = arith.constant dense<0.000000e+00> : vector<64x128xf32>
    %13 = tpu.matmul %12, %0, %cst {dimension_numbers = #tpu.dot_dimension_numbers<[1], [0], [0], [1], [0, 0, 1, 1], [], []>} : vector<64x16xf32>, vector<16x128xf32>, vector<64x128xf32> -> vector<64x128xf32>
    %14 = vector.broadcast %8 : vector<1x128xf32> to vector<64x128xf32>
    %15 = arith.addf %13, %14 : vector<64x128xf32>
    %16 = vector.extract_strided_slice %15 {offsets = [0, 0], sizes = [8, 128], strides = [1, 1]} : vector<64x128xf32> to vector<8x128xf32>
    %17 = math.tanh %16 : vector<8x128xf32>
    %18 = vector.extract_strided_slice %17 {offsets = [0, 0], sizes = [8, 32], strides = [1, 1]} : vector<8x128xf32> to vector<8x32xf32>
    %cst_12 = arith.constant 1.000000e+00 : f32
    %19 = vector.broadcast %cst_12 : f32 to vector<8x32xf32>
    %20 = arith.addf %18, %19 : vector<8x32xf32>
    %cst_13 = arith.constant 5.000000e-01 : f32
    %21 = vector.broadcast %cst_13 : f32 to vector<8x32xf32>
    %22 = arith.mulf %21, %20 : vector<8x32xf32>
    %23 = vector.extract_strided_slice %17 {offsets = [0, 64], sizes = [8, 32], strides = [1, 1]} : vector<8x128xf32> to vector<8x32xf32>
    %24 = vector.extract_strided_slice %17 {offsets = [0, 96], sizes = [8, 32], strides = [1, 1]} : vector<8x128xf32> to vector<8x32xf32>
    %cst_14 = arith.constant 1.000000e+00 : f32
    %25 = vector.broadcast %cst_14 : f32 to vector<8x32xf32>
    %26 = arith.addf %24, %25 : vector<8x32xf32>
    %cst_15 = arith.constant 5.000000e-01 : f32
    %27 = vector.broadcast %cst_15 : f32 to vector<8x32xf32>
    %28 = arith.mulf %27, %26 : vector<8x32xf32>
    %29 = arith.mulf %22, %23 : vector<8x32xf32>
    %30 = math.tanh %29 : vector<8x32xf32>
    %31 = arith.mulf %28, %30 : vector<8x32xf32>
    %32 = arith.truncf %31 : vector<8x32xf32> to vector<8x32xbf16>
    %cst_16 = arith.constant dense<0.000000e+00> : vector<8x128xf32>
    %33 = tpu.matmul %32, %4, %cst_16 {dimension_numbers = #tpu.dot_dimension_numbers<[1], [0], [0], [1], [0, 0, 1, 1], [], []>} : vector<8x32xbf16>, vector<32x128xbf16>, vector<8x128xf32> -> vector<8x128xf32>
    %34 = vector.broadcast %9 : vector<1x128xf32> to vector<8x128xf32>
    %35 = arith.addf %33, %34 : vector<8x128xf32>
    %36 = math.tanh %35 : vector<8x128xf32>
    %37 = vector.extract_strided_slice %36 {offsets = [0, 0], sizes = [8, 32], strides = [1, 1]} : vector<8x128xf32> to vector<8x32xf32>
    %cst_17 = arith.constant 1.000000e+00 : f32
    %38 = vector.broadcast %cst_17 : f32 to vector<8x32xf32>
    %39 = arith.addf %37, %38 : vector<8x32xf32>
    %cst_18 = arith.constant 5.000000e-01 : f32
    %40 = vector.broadcast %cst_18 : f32 to vector<8x32xf32>
    %41 = arith.mulf %40, %39 : vector<8x32xf32>
    %42 = vector.extract_strided_slice %36 {offsets = [0, 64], sizes = [8, 32], strides = [1, 1]} : vector<8x128xf32> to vector<8x32xf32>
    %43 = vector.extract_strided_slice %36 {offsets = [0, 96], sizes = [8, 32], strides = [1, 1]} : vector<8x128xf32> to vector<8x32xf32>
    %cst_19 = arith.constant 1.000000e+00 : f32
    %44 = vector.broadcast %cst_19 : f32 to vector<8x32xf32>
    %45 = arith.addf %43, %44 : vector<8x32xf32>
    %cst_20 = arith.constant 5.000000e-01 : f32
    %46 = vector.broadcast %cst_20 : f32 to vector<8x32xf32>
    %47 = arith.mulf %46, %45 : vector<8x32xf32>
    %48 = arith.mulf %41, %42 : vector<8x32xf32>
    %49 = math.tanh %48 : vector<8x32xf32>
    %50 = arith.mulf %47, %49 : vector<8x32xf32>
    %51 = vector.extract_strided_slice %15 {offsets = [8, 0], sizes = [8, 128], strides = [1, 1]} : vector<64x128xf32> to vector<8x128xf32>
    %52 = arith.truncf %50 : vector<8x32xf32> to vector<8x32xbf16>
    %cst_21 = arith.constant dense<0.000000e+00> : vector<8x128xf32>
    %53 = tpu.matmul %52, %6, %cst_21 {dimension_numbers = #tpu.dot_dimension_numbers<[1], [0], [0], [1], [0, 0, 1, 1], [], []>} : vector<8x32xbf16>, vector<32x128xbf16>, vector<8x128xf32> -> vector<8x128xf32>
    %54 = vector.broadcast %9 : vector<1x128xf32> to vector<8x128xf32>
    %55 = arith.addf %53, %54 : vector<8x128xf32>
    %56 = arith.truncf %31 : vector<8x32xf32> to vector<8x32xbf16>
    %cst_22 = arith.constant dense<0.000000e+00> : vector<8x128xf32>
    %57 = tpu.matmul %56, %2, %cst_22 {dimension_numbers = #tpu.dot_dimension_numbers<[1], [0], [0], [1], [0, 0, 1, 1], [], []>} : vector<8x32xbf16>, vector<32x128xbf16>, vector<8x128xf32> -> vector<8x128xf32>
    %58 = arith.addf %51, %57 : vector<8x128xf32>
    %59 = math.tanh %58 : vector<8x128xf32>
    %60 = vector.extract_strided_slice %59 {offsets = [0, 0], sizes = [8, 32], strides = [1, 1]} : vector<8x128xf32> to vector<8x32xf32>
    %cst_23 = arith.constant 1.000000e+00 : f32
    %61 = vector.broadcast %cst_23 : f32 to vector<8x32xf32>
    %62 = arith.addf %60, %61 : vector<8x32xf32>
    %cst_24 = arith.constant 5.000000e-01 : f32
    %63 = vector.broadcast %cst_24 : f32 to vector<8x32xf32>
    %64 = arith.mulf %63, %62 : vector<8x32xf32>
    %65 = vector.extract_strided_slice %59 {offsets = [0, 32], sizes = [8, 32], strides = [1, 1]} : vector<8x128xf32> to vector<8x32xf32>
    %cst_25 = arith.constant 1.000000e+00 : f32
    %66 = vector.broadcast %cst_25 : f32 to vector<8x32xf32>
    %67 = arith.addf %65, %66 : vector<8x32xf32>
    %cst_26 = arith.constant 5.000000e-01 : f32
    %68 = vector.broadcast %cst_26 : f32 to vector<8x32xf32>
    %69 = arith.mulf %68, %67 : vector<8x32xf32>
    %70 = vector.extract_strided_slice %59 {offsets = [0, 64], sizes = [8, 32], strides = [1, 1]} : vector<8x128xf32> to vector<8x32xf32>
    %71 = vector.extract_strided_slice %59 {offsets = [0, 96], sizes = [8, 32], strides = [1, 1]} : vector<8x128xf32> to vector<8x32xf32>
    %cst_27 = arith.constant 1.000000e+00 : f32
    %72 = vector.broadcast %cst_27 : f32 to vector<8x32xf32>
    %73 = arith.addf %71, %72 : vector<8x32xf32>
    %cst_28 = arith.constant 5.000000e-01 : f32
    %74 = vector.broadcast %cst_28 : f32 to vector<8x32xf32>
    %75 = arith.mulf %74, %73 : vector<8x32xf32>
    %76 = arith.mulf %69, %29 : vector<8x32xf32>
    %77 = arith.mulf %64, %70 : vector<8x32xf32>
    %78 = arith.addf %76, %77 : vector<8x32xf32>
    %79 = math.tanh %78 : vector<8x32xf32>
    %80 = arith.mulf %75, %79 : vector<8x32xf32>
    %81 = arith.truncf %80 : vector<8x32xf32> to vector<8x32xbf16>
    %cst_29 = arith.constant dense<0.000000e+00> : vector<8x128xf32>
    %82 = tpu.matmul %81, %4, %cst_29 {dimension_numbers = #tpu.dot_dimension_numbers<[1], [0], [0], [1], [0, 0, 1, 1], [], []>} : vector<8x32xbf16>, vector<32x128xbf16>, vector<8x128xf32> -> vector<8x128xf32>
    %83 = arith.addf %82, %55 : vector<8x128xf32>
    %84 = math.tanh %83 : vector<8x128xf32>
    %85 = vector.extract_strided_slice %84 {offsets = [0, 0], sizes = [8, 32], strides = [1, 1]} : vector<8x128xf32> to vector<8x32xf32>
    %cst_30 = arith.constant 1.000000e+00 : f32
    %86 = vector.broadcast %cst_30 : f32 to vector<8x32xf32>
    %87 = arith.addf %85, %86 : vector<8x32xf32>
    %cst_31 = arith.constant 5.000000e-01 : f32
    %88 = vector.broadcast %cst_31 : f32 to vector<8x32xf32>
    %89 = arith.mulf %88, %87 : vector<8x32xf32>
    %90 = vector.extract_strided_slice %84 {offsets = [0, 32], sizes = [8, 32], strides = [1, 1]} : vector<8x128xf32> to vector<8x32xf32>
    %cst_32 = arith.constant 1.000000e+00 : f32
    %91 = vector.broadcast %cst_32 : f32 to vector<8x32xf32>
    %92 = arith.addf %90, %91 : vector<8x32xf32>
    %cst_33 = arith.constant 5.000000e-01 : f32
    %93 = vector.broadcast %cst_33 : f32 to vector<8x32xf32>
    %94 = arith.mulf %93, %92 : vector<8x32xf32>
    %95 = vector.extract_strided_slice %84 {offsets = [0, 64], sizes = [8, 32], strides = [1, 1]} : vector<8x128xf32> to vector<8x32xf32>
    %96 = vector.extract_strided_slice %84 {offsets = [0, 96], sizes = [8, 32], strides = [1, 1]} : vector<8x128xf32> to vector<8x32xf32>
    %cst_34 = arith.constant 1.000000e+00 : f32
    %97 = vector.broadcast %cst_34 : f32 to vector<8x32xf32>
    %98 = arith.addf %96, %97 : vector<8x32xf32>
    %cst_35 = arith.constant 5.000000e-01 : f32
    %99 = vector.broadcast %cst_35 : f32 to vector<8x32xf32>
    %100 = arith.mulf %99, %98 : vector<8x32xf32>
    %101 = arith.mulf %94, %48 : vector<8x32xf32>
    %102 = arith.mulf %89, %95 : vector<8x32xf32>
    %103 = arith.addf %101, %102 : vector<8x32xf32>
    %104 = math.tanh %103 : vector<8x32xf32>
    %105 = arith.mulf %100, %104 : vector<8x32xf32>
    %106 = vector.extract_strided_slice %15 {offsets = [16, 0], sizes = [8, 128], strides = [1, 1]} : vector<64x128xf32> to vector<8x128xf32>
    %107 = arith.truncf %105 : vector<8x32xf32> to vector<8x32xbf16>
    %cst_36 = arith.constant dense<0.000000e+00> : vector<8x128xf32>
    %108 = tpu.matmul %107, %6, %cst_36 {dimension_numbers = #tpu.dot_dimension_numbers<[1], [0], [0], [1], [0, 0, 1, 1], [], []>} : vector<8x32xbf16>, vector<32x128xbf16>, vector<8x128xf32> -> vector<8x128xf32>
    %109 = vector.broadcast %9 : vector<1x128xf32> to vector<8x128xf32>
    %110 = arith.addf %108, %109 : vector<8x128xf32>
    %111 = arith.truncf %80 : vector<8x32xf32> to vector<8x32xbf16>
    %cst_37 = arith.constant dense<0.000000e+00> : vector<8x128xf32>
    %112 = tpu.matmul %111, %2, %cst_37 {dimension_numbers = #tpu.dot_dimension_numbers<[1], [0], [0], [1], [0, 0, 1, 1], [], []>} : vector<8x32xbf16>, vector<32x128xbf16>, vector<8x128xf32> -> vector<8x128xf32>
    %113 = arith.addf %106, %112 : vector<8x128xf32>
    %114 = math.tanh %113 : vector<8x128xf32>
    %115 = vector.extract_strided_slice %114 {offsets = [0, 0], sizes = [8, 32], strides = [1, 1]} : vector<8x128xf32> to vector<8x32xf32>
    %cst_38 = arith.constant 1.000000e+00 : f32
    %116 = vector.broadcast %cst_38 : f32 to vector<8x32xf32>
    %117 = arith.addf %115, %116 : vector<8x32xf32>
    %cst_39 = arith.constant 5.000000e-01 : f32
    %118 = vector.broadcast %cst_39 : f32 to vector<8x32xf32>
    %119 = arith.mulf %118, %117 : vector<8x32xf32>
    %120 = vector.extract_strided_slice %114 {offsets = [0, 32], sizes = [8, 32], strides = [1, 1]} : vector<8x128xf32> to vector<8x32xf32>
    %cst_40 = arith.constant 1.000000e+00 : f32
    %121 = vector.broadcast %cst_40 : f32 to vector<8x32xf32>
    %122 = arith.addf %120, %121 : vector<8x32xf32>
    %cst_41 = arith.constant 5.000000e-01 : f32
    %123 = vector.broadcast %cst_41 : f32 to vector<8x32xf32>
    %124 = arith.mulf %123, %122 : vector<8x32xf32>
    %125 = vector.extract_strided_slice %114 {offsets = [0, 64], sizes = [8, 32], strides = [1, 1]} : vector<8x128xf32> to vector<8x32xf32>
    %126 = vector.extract_strided_slice %114 {offsets = [0, 96], sizes = [8, 32], strides = [1, 1]} : vector<8x128xf32> to vector<8x32xf32>
    %cst_42 = arith.constant 1.000000e+00 : f32
    %127 = vector.broadcast %cst_42 : f32 to vector<8x32xf32>
    %128 = arith.addf %126, %127 : vector<8x32xf32>
    %cst_43 = arith.constant 5.000000e-01 : f32
    %129 = vector.broadcast %cst_43 : f32 to vector<8x32xf32>
    %130 = arith.mulf %129, %128 : vector<8x32xf32>
    %131 = arith.mulf %124, %78 : vector<8x32xf32>
    %132 = arith.mulf %119, %125 : vector<8x32xf32>
    %133 = arith.addf %131, %132 : vector<8x32xf32>
    %134 = math.tanh %133 : vector<8x32xf32>
    %135 = arith.mulf %130, %134 : vector<8x32xf32>
    %136 = arith.truncf %135 : vector<8x32xf32> to vector<8x32xbf16>
    %cst_44 = arith.constant dense<0.000000e+00> : vector<8x128xf32>
    %137 = tpu.matmul %136, %4, %cst_44 {dimension_numbers = #tpu.dot_dimension_numbers<[1], [0], [0], [1], [0, 0, 1, 1], [], []>} : vector<8x32xbf16>, vector<32x128xbf16>, vector<8x128xf32> -> vector<8x128xf32>
    %138 = arith.addf %137, %110 : vector<8x128xf32>
    %139 = math.tanh %138 : vector<8x128xf32>
    %140 = vector.extract_strided_slice %139 {offsets = [0, 0], sizes = [8, 32], strides = [1, 1]} : vector<8x128xf32> to vector<8x32xf32>
    %cst_45 = arith.constant 1.000000e+00 : f32
    %141 = vector.broadcast %cst_45 : f32 to vector<8x32xf32>
    %142 = arith.addf %140, %141 : vector<8x32xf32>
    %cst_46 = arith.constant 5.000000e-01 : f32
    %143 = vector.broadcast %cst_46 : f32 to vector<8x32xf32>
    %144 = arith.mulf %143, %142 : vector<8x32xf32>
    %145 = vector.extract_strided_slice %139 {offsets = [0, 32], sizes = [8, 32], strides = [1, 1]} : vector<8x128xf32> to vector<8x32xf32>
    %cst_47 = arith.constant 1.000000e+00 : f32
    %146 = vector.broadcast %cst_47 : f32 to vector<8x32xf32>
    %147 = arith.addf %145, %146 : vector<8x32xf32>
    %cst_48 = arith.constant 5.000000e-01 : f32
    %148 = vector.broadcast %cst_48 : f32 to vector<8x32xf32>
    %149 = arith.mulf %148, %147 : vector<8x32xf32>
    %150 = vector.extract_strided_slice %139 {offsets = [0, 64], sizes = [8, 32], strides = [1, 1]} : vector<8x128xf32> to vector<8x32xf32>
    %151 = vector.extract_strided_slice %139 {offsets = [0, 96], sizes = [8, 32], strides = [1, 1]} : vector<8x128xf32> to vector<8x32xf32>
    %cst_49 = arith.constant 1.000000e+00 : f32
    %152 = vector.broadcast %cst_49 : f32 to vector<8x32xf32>
    %153 = arith.addf %151, %152 : vector<8x32xf32>
    %cst_50 = arith.constant 5.000000e-01 : f32
    %154 = vector.broadcast %cst_50 : f32 to vector<8x32xf32>
    %155 = arith.mulf %154, %153 : vector<8x32xf32>
    %156 = arith.mulf %149, %103 : vector<8x32xf32>
    %157 = arith.mulf %144, %150 : vector<8x32xf32>
    %158 = arith.addf %156, %157 : vector<8x32xf32>
    %159 = math.tanh %158 : vector<8x32xf32>
    %160 = arith.mulf %155, %159 : vector<8x32xf32>
    %161 = vector.extract_strided_slice %15 {offsets = [24, 0], sizes = [8, 128], strides = [1, 1]} : vector<64x128xf32> to vector<8x128xf32>
    %162 = arith.truncf %160 : vector<8x32xf32> to vector<8x32xbf16>
    %cst_51 = arith.constant dense<0.000000e+00> : vector<8x128xf32>
    %163 = tpu.matmul %162, %6, %cst_51 {dimension_numbers = #tpu.dot_dimension_numbers<[1], [0], [0], [1], [0, 0, 1, 1], [], []>} : vector<8x32xbf16>, vector<32x128xbf16>, vector<8x128xf32> -> vector<8x128xf32>
    %164 = vector.broadcast %9 : vector<1x128xf32> to vector<8x128xf32>
    %165 = arith.addf %163, %164 : vector<8x128xf32>
    %166 = arith.truncf %135 : vector<8x32xf32> to vector<8x32xbf16>
    %cst_52 = arith.constant dense<0.000000e+00> : vector<8x128xf32>
    %167 = tpu.matmul %166, %2, %cst_52 {dimension_numbers = #tpu.dot_dimension_numbers<[1], [0], [0], [1], [0, 0, 1, 1], [], []>} : vector<8x32xbf16>, vector<32x128xbf16>, vector<8x128xf32> -> vector<8x128xf32>
    %168 = arith.addf %161, %167 : vector<8x128xf32>
    %169 = math.tanh %168 : vector<8x128xf32>
    %170 = vector.extract_strided_slice %169 {offsets = [0, 0], sizes = [8, 32], strides = [1, 1]} : vector<8x128xf32> to vector<8x32xf32>
    %cst_53 = arith.constant 1.000000e+00 : f32
    %171 = vector.broadcast %cst_53 : f32 to vector<8x32xf32>
    %172 = arith.addf %170, %171 : vector<8x32xf32>
    %cst_54 = arith.constant 5.000000e-01 : f32
    %173 = vector.broadcast %cst_54 : f32 to vector<8x32xf32>
    %174 = arith.mulf %173, %172 : vector<8x32xf32>
    %175 = vector.extract_strided_slice %169 {offsets = [0, 32], sizes = [8, 32], strides = [1, 1]} : vector<8x128xf32> to vector<8x32xf32>
    %cst_55 = arith.constant 1.000000e+00 : f32
    %176 = vector.broadcast %cst_55 : f32 to vector<8x32xf32>
    %177 = arith.addf %175, %176 : vector<8x32xf32>
    %cst_56 = arith.constant 5.000000e-01 : f32
    %178 = vector.broadcast %cst_56 : f32 to vector<8x32xf32>
    %179 = arith.mulf %178, %177 : vector<8x32xf32>
    %180 = vector.extract_strided_slice %169 {offsets = [0, 64], sizes = [8, 32], strides = [1, 1]} : vector<8x128xf32> to vector<8x32xf32>
    %181 = vector.extract_strided_slice %169 {offsets = [0, 96], sizes = [8, 32], strides = [1, 1]} : vector<8x128xf32> to vector<8x32xf32>
    %cst_57 = arith.constant 1.000000e+00 : f32
    %182 = vector.broadcast %cst_57 : f32 to vector<8x32xf32>
    %183 = arith.addf %181, %182 : vector<8x32xf32>
    %cst_58 = arith.constant 5.000000e-01 : f32
    %184 = vector.broadcast %cst_58 : f32 to vector<8x32xf32>
    %185 = arith.mulf %184, %183 : vector<8x32xf32>
    %186 = arith.mulf %179, %133 : vector<8x32xf32>
    %187 = arith.mulf %174, %180 : vector<8x32xf32>
    %188 = arith.addf %186, %187 : vector<8x32xf32>
    %189 = math.tanh %188 : vector<8x32xf32>
    %190 = arith.mulf %185, %189 : vector<8x32xf32>
    %191 = arith.truncf %190 : vector<8x32xf32> to vector<8x32xbf16>
    %cst_59 = arith.constant dense<0.000000e+00> : vector<8x128xf32>
    %192 = tpu.matmul %191, %4, %cst_59 {dimension_numbers = #tpu.dot_dimension_numbers<[1], [0], [0], [1], [0, 0, 1, 1], [], []>} : vector<8x32xbf16>, vector<32x128xbf16>, vector<8x128xf32> -> vector<8x128xf32>
    %193 = arith.addf %192, %165 : vector<8x128xf32>
    %194 = math.tanh %193 : vector<8x128xf32>
    %195 = vector.extract_strided_slice %194 {offsets = [0, 0], sizes = [8, 32], strides = [1, 1]} : vector<8x128xf32> to vector<8x32xf32>
    %cst_60 = arith.constant 1.000000e+00 : f32
    %196 = vector.broadcast %cst_60 : f32 to vector<8x32xf32>
    %197 = arith.addf %195, %196 : vector<8x32xf32>
    %cst_61 = arith.constant 5.000000e-01 : f32
    %198 = vector.broadcast %cst_61 : f32 to vector<8x32xf32>
    %199 = arith.mulf %198, %197 : vector<8x32xf32>
    %200 = vector.extract_strided_slice %194 {offsets = [0, 32], sizes = [8, 32], strides = [1, 1]} : vector<8x128xf32> to vector<8x32xf32>
    %cst_62 = arith.constant 1.000000e+00 : f32
    %201 = vector.broadcast %cst_62 : f32 to vector<8x32xf32>
    %202 = arith.addf %200, %201 : vector<8x32xf32>
    %cst_63 = arith.constant 5.000000e-01 : f32
    %203 = vector.broadcast %cst_63 : f32 to vector<8x32xf32>
    %204 = arith.mulf %203, %202 : vector<8x32xf32>
    %205 = vector.extract_strided_slice %194 {offsets = [0, 64], sizes = [8, 32], strides = [1, 1]} : vector<8x128xf32> to vector<8x32xf32>
    %206 = vector.extract_strided_slice %194 {offsets = [0, 96], sizes = [8, 32], strides = [1, 1]} : vector<8x128xf32> to vector<8x32xf32>
    %cst_64 = arith.constant 1.000000e+00 : f32
    %207 = vector.broadcast %cst_64 : f32 to vector<8x32xf32>
    %208 = arith.addf %206, %207 : vector<8x32xf32>
    %cst_65 = arith.constant 5.000000e-01 : f32
    %209 = vector.broadcast %cst_65 : f32 to vector<8x32xf32>
    %210 = arith.mulf %209, %208 : vector<8x32xf32>
    %211 = arith.mulf %204, %158 : vector<8x32xf32>
    %212 = arith.mulf %199, %205 : vector<8x32xf32>
    %213 = arith.addf %211, %212 : vector<8x32xf32>
    %214 = math.tanh %213 : vector<8x32xf32>
    %215 = arith.mulf %210, %214 : vector<8x32xf32>
    %216 = vector.extract_strided_slice %15 {offsets = [32, 0], sizes = [8, 128], strides = [1, 1]} : vector<64x128xf32> to vector<8x128xf32>
    %217 = arith.truncf %215 : vector<8x32xf32> to vector<8x32xbf16>
    %cst_66 = arith.constant dense<0.000000e+00> : vector<8x128xf32>
    %218 = tpu.matmul %217, %6, %cst_66 {dimension_numbers = #tpu.dot_dimension_numbers<[1], [0], [0], [1], [0, 0, 1, 1], [], []>} : vector<8x32xbf16>, vector<32x128xbf16>, vector<8x128xf32> -> vector<8x128xf32>
    %219 = vector.broadcast %9 : vector<1x128xf32> to vector<8x128xf32>
    %220 = arith.addf %218, %219 : vector<8x128xf32>
    %221 = arith.truncf %190 : vector<8x32xf32> to vector<8x32xbf16>
    %cst_67 = arith.constant dense<0.000000e+00> : vector<8x128xf32>
    %222 = tpu.matmul %221, %2, %cst_67 {dimension_numbers = #tpu.dot_dimension_numbers<[1], [0], [0], [1], [0, 0, 1, 1], [], []>} : vector<8x32xbf16>, vector<32x128xbf16>, vector<8x128xf32> -> vector<8x128xf32>
    %223 = arith.addf %216, %222 : vector<8x128xf32>
    %224 = math.tanh %223 : vector<8x128xf32>
    %225 = vector.extract_strided_slice %224 {offsets = [0, 0], sizes = [8, 32], strides = [1, 1]} : vector<8x128xf32> to vector<8x32xf32>
    %cst_68 = arith.constant 1.000000e+00 : f32
    %226 = vector.broadcast %cst_68 : f32 to vector<8x32xf32>
    %227 = arith.addf %225, %226 : vector<8x32xf32>
    %cst_69 = arith.constant 5.000000e-01 : f32
    %228 = vector.broadcast %cst_69 : f32 to vector<8x32xf32>
    %229 = arith.mulf %228, %227 : vector<8x32xf32>
    %230 = vector.extract_strided_slice %224 {offsets = [0, 32], sizes = [8, 32], strides = [1, 1]} : vector<8x128xf32> to vector<8x32xf32>
    %cst_70 = arith.constant 1.000000e+00 : f32
    %231 = vector.broadcast %cst_70 : f32 to vector<8x32xf32>
    %232 = arith.addf %230, %231 : vector<8x32xf32>
    %cst_71 = arith.constant 5.000000e-01 : f32
    %233 = vector.broadcast %cst_71 : f32 to vector<8x32xf32>
    %234 = arith.mulf %233, %232 : vector<8x32xf32>
    %235 = vector.extract_strided_slice %224 {offsets = [0, 64], sizes = [8, 32], strides = [1, 1]} : vector<8x128xf32> to vector<8x32xf32>
    %236 = vector.extract_strided_slice %224 {offsets = [0, 96], sizes = [8, 32], strides = [1, 1]} : vector<8x128xf32> to vector<8x32xf32>
    %cst_72 = arith.constant 1.000000e+00 : f32
    %237 = vector.broadcast %cst_72 : f32 to vector<8x32xf32>
    %238 = arith.addf %236, %237 : vector<8x32xf32>
    %cst_73 = arith.constant 5.000000e-01 : f32
    %239 = vector.broadcast %cst_73 : f32 to vector<8x32xf32>
    %240 = arith.mulf %239, %238 : vector<8x32xf32>
    %241 = arith.mulf %234, %188 : vector<8x32xf32>
    %242 = arith.mulf %229, %235 : vector<8x32xf32>
    %243 = arith.addf %241, %242 : vector<8x32xf32>
    %244 = math.tanh %243 : vector<8x32xf32>
    %245 = arith.mulf %240, %244 : vector<8x32xf32>
    %246 = arith.truncf %245 : vector<8x32xf32> to vector<8x32xbf16>
    %cst_74 = arith.constant dense<0.000000e+00> : vector<8x128xf32>
    %247 = tpu.matmul %246, %4, %cst_74 {dimension_numbers = #tpu.dot_dimension_numbers<[1], [0], [0], [1], [0, 0, 1, 1], [], []>} : vector<8x32xbf16>, vector<32x128xbf16>, vector<8x128xf32> -> vector<8x128xf32>
    %248 = arith.addf %247, %220 : vector<8x128xf32>
    %249 = math.tanh %248 : vector<8x128xf32>
    %250 = vector.extract_strided_slice %249 {offsets = [0, 0], sizes = [8, 32], strides = [1, 1]} : vector<8x128xf32> to vector<8x32xf32>
    %cst_75 = arith.constant 1.000000e+00 : f32
    %251 = vector.broadcast %cst_75 : f32 to vector<8x32xf32>
    %252 = arith.addf %250, %251 : vector<8x32xf32>
    %cst_76 = arith.constant 5.000000e-01 : f32
    %253 = vector.broadcast %cst_76 : f32 to vector<8x32xf32>
    %254 = arith.mulf %253, %252 : vector<8x32xf32>
    %255 = vector.extract_strided_slice %249 {offsets = [0, 32], sizes = [8, 32], strides = [1, 1]} : vector<8x128xf32> to vector<8x32xf32>
    %cst_77 = arith.constant 1.000000e+00 : f32
    %256 = vector.broadcast %cst_77 : f32 to vector<8x32xf32>
    %257 = arith.addf %255, %256 : vector<8x32xf32>
    %cst_78 = arith.constant 5.000000e-01 : f32
    %258 = vector.broadcast %cst_78 : f32 to vector<8x32xf32>
    %259 = arith.mulf %258, %257 : vector<8x32xf32>
    %260 = vector.extract_strided_slice %249 {offsets = [0, 64], sizes = [8, 32], strides = [1, 1]} : vector<8x128xf32> to vector<8x32xf32>
    %261 = vector.extract_strided_slice %249 {offsets = [0, 96], sizes = [8, 32], strides = [1, 1]} : vector<8x128xf32> to vector<8x32xf32>
    %cst_79 = arith.constant 1.000000e+00 : f32
    %262 = vector.broadcast %cst_79 : f32 to vector<8x32xf32>
    %263 = arith.addf %261, %262 : vector<8x32xf32>
    %cst_80 = arith.constant 5.000000e-01 : f32
    %264 = vector.broadcast %cst_80 : f32 to vector<8x32xf32>
    %265 = arith.mulf %264, %263 : vector<8x32xf32>
    %266 = arith.mulf %259, %213 : vector<8x32xf32>
    %267 = arith.mulf %254, %260 : vector<8x32xf32>
    %268 = arith.addf %266, %267 : vector<8x32xf32>
    %269 = math.tanh %268 : vector<8x32xf32>
    %270 = arith.mulf %265, %269 : vector<8x32xf32>
    %271 = vector.extract_strided_slice %15 {offsets = [40, 0], sizes = [8, 128], strides = [1, 1]} : vector<64x128xf32> to vector<8x128xf32>
    %272 = arith.truncf %270 : vector<8x32xf32> to vector<8x32xbf16>
    %cst_81 = arith.constant dense<0.000000e+00> : vector<8x128xf32>
    %273 = tpu.matmul %272, %6, %cst_81 {dimension_numbers = #tpu.dot_dimension_numbers<[1], [0], [0], [1], [0, 0, 1, 1], [], []>} : vector<8x32xbf16>, vector<32x128xbf16>, vector<8x128xf32> -> vector<8x128xf32>
    %274 = vector.broadcast %9 : vector<1x128xf32> to vector<8x128xf32>
    %275 = arith.addf %273, %274 : vector<8x128xf32>
    %276 = arith.truncf %245 : vector<8x32xf32> to vector<8x32xbf16>
    %cst_82 = arith.constant dense<0.000000e+00> : vector<8x128xf32>
    %277 = tpu.matmul %276, %2, %cst_82 {dimension_numbers = #tpu.dot_dimension_numbers<[1], [0], [0], [1], [0, 0, 1, 1], [], []>} : vector<8x32xbf16>, vector<32x128xbf16>, vector<8x128xf32> -> vector<8x128xf32>
    %278 = arith.addf %271, %277 : vector<8x128xf32>
    %279 = math.tanh %278 : vector<8x128xf32>
    %280 = vector.extract_strided_slice %279 {offsets = [0, 0], sizes = [8, 32], strides = [1, 1]} : vector<8x128xf32> to vector<8x32xf32>
    %cst_83 = arith.constant 1.000000e+00 : f32
    %281 = vector.broadcast %cst_83 : f32 to vector<8x32xf32>
    %282 = arith.addf %280, %281 : vector<8x32xf32>
    %cst_84 = arith.constant 5.000000e-01 : f32
    %283 = vector.broadcast %cst_84 : f32 to vector<8x32xf32>
    %284 = arith.mulf %283, %282 : vector<8x32xf32>
    %285 = vector.extract_strided_slice %279 {offsets = [0, 32], sizes = [8, 32], strides = [1, 1]} : vector<8x128xf32> to vector<8x32xf32>
    %cst_85 = arith.constant 1.000000e+00 : f32
    %286 = vector.broadcast %cst_85 : f32 to vector<8x32xf32>
    %287 = arith.addf %285, %286 : vector<8x32xf32>
    %cst_86 = arith.constant 5.000000e-01 : f32
    %288 = vector.broadcast %cst_86 : f32 to vector<8x32xf32>
    %289 = arith.mulf %288, %287 : vector<8x32xf32>
    %290 = vector.extract_strided_slice %279 {offsets = [0, 64], sizes = [8, 32], strides = [1, 1]} : vector<8x128xf32> to vector<8x32xf32>
    %291 = vector.extract_strided_slice %279 {offsets = [0, 96], sizes = [8, 32], strides = [1, 1]} : vector<8x128xf32> to vector<8x32xf32>
    %cst_87 = arith.constant 1.000000e+00 : f32
    %292 = vector.broadcast %cst_87 : f32 to vector<8x32xf32>
    %293 = arith.addf %291, %292 : vector<8x32xf32>
    %cst_88 = arith.constant 5.000000e-01 : f32
    %294 = vector.broadcast %cst_88 : f32 to vector<8x32xf32>
    %295 = arith.mulf %294, %293 : vector<8x32xf32>
    %296 = arith.mulf %289, %243 : vector<8x32xf32>
    %297 = arith.mulf %284, %290 : vector<8x32xf32>
    %298 = arith.addf %296, %297 : vector<8x32xf32>
    %299 = math.tanh %298 : vector<8x32xf32>
    %300 = arith.mulf %295, %299 : vector<8x32xf32>
    %301 = arith.truncf %300 : vector<8x32xf32> to vector<8x32xbf16>
    %cst_89 = arith.constant dense<0.000000e+00> : vector<8x128xf32>
    %302 = tpu.matmul %301, %4, %cst_89 {dimension_numbers = #tpu.dot_dimension_numbers<[1], [0], [0], [1], [0, 0, 1, 1], [], []>} : vector<8x32xbf16>, vector<32x128xbf16>, vector<8x128xf32> -> vector<8x128xf32>
    %303 = arith.addf %302, %275 : vector<8x128xf32>
    %304 = math.tanh %303 : vector<8x128xf32>
    %305 = vector.extract_strided_slice %304 {offsets = [0, 0], sizes = [8, 32], strides = [1, 1]} : vector<8x128xf32> to vector<8x32xf32>
    %cst_90 = arith.constant 1.000000e+00 : f32
    %306 = vector.broadcast %cst_90 : f32 to vector<8x32xf32>
    %307 = arith.addf %305, %306 : vector<8x32xf32>
    %cst_91 = arith.constant 5.000000e-01 : f32
    %308 = vector.broadcast %cst_91 : f32 to vector<8x32xf32>
    %309 = arith.mulf %308, %307 : vector<8x32xf32>
    %310 = vector.extract_strided_slice %304 {offsets = [0, 32], sizes = [8, 32], strides = [1, 1]} : vector<8x128xf32> to vector<8x32xf32>
    %cst_92 = arith.constant 1.000000e+00 : f32
    %311 = vector.broadcast %cst_92 : f32 to vector<8x32xf32>
    %312 = arith.addf %310, %311 : vector<8x32xf32>
    %cst_93 = arith.constant 5.000000e-01 : f32
    %313 = vector.broadcast %cst_93 : f32 to vector<8x32xf32>
    %314 = arith.mulf %313, %312 : vector<8x32xf32>
    %315 = vector.extract_strided_slice %304 {offsets = [0, 64], sizes = [8, 32], strides = [1, 1]} : vector<8x128xf32> to vector<8x32xf32>
    %316 = vector.extract_strided_slice %304 {offsets = [0, 96], sizes = [8, 32], strides = [1, 1]} : vector<8x128xf32> to vector<8x32xf32>
    %cst_94 = arith.constant 1.000000e+00 : f32
    %317 = vector.broadcast %cst_94 : f32 to vector<8x32xf32>
    %318 = arith.addf %316, %317 : vector<8x32xf32>
    %cst_95 = arith.constant 5.000000e-01 : f32
    %319 = vector.broadcast %cst_95 : f32 to vector<8x32xf32>
    %320 = arith.mulf %319, %318 : vector<8x32xf32>
    %321 = arith.mulf %314, %268 : vector<8x32xf32>
    %322 = arith.mulf %309, %315 : vector<8x32xf32>
    %323 = arith.addf %321, %322 : vector<8x32xf32>
    %324 = math.tanh %323 : vector<8x32xf32>
    %325 = arith.mulf %320, %324 : vector<8x32xf32>
    %326 = vector.extract_strided_slice %15 {offsets = [48, 0], sizes = [8, 128], strides = [1, 1]} : vector<64x128xf32> to vector<8x128xf32>
    %327 = arith.truncf %325 : vector<8x32xf32> to vector<8x32xbf16>
    %cst_96 = arith.constant dense<0.000000e+00> : vector<8x128xf32>
    %328 = tpu.matmul %327, %6, %cst_96 {dimension_numbers = #tpu.dot_dimension_numbers<[1], [0], [0], [1], [0, 0, 1, 1], [], []>} : vector<8x32xbf16>, vector<32x128xbf16>, vector<8x128xf32> -> vector<8x128xf32>
    %329 = vector.broadcast %9 : vector<1x128xf32> to vector<8x128xf32>
    %330 = arith.addf %328, %329 : vector<8x128xf32>
    %331 = arith.truncf %300 : vector<8x32xf32> to vector<8x32xbf16>
    %cst_97 = arith.constant dense<0.000000e+00> : vector<8x128xf32>
    %332 = tpu.matmul %331, %2, %cst_97 {dimension_numbers = #tpu.dot_dimension_numbers<[1], [0], [0], [1], [0, 0, 1, 1], [], []>} : vector<8x32xbf16>, vector<32x128xbf16>, vector<8x128xf32> -> vector<8x128xf32>
    %333 = arith.addf %326, %332 : vector<8x128xf32>
    %334 = math.tanh %333 : vector<8x128xf32>
    %335 = vector.extract_strided_slice %334 {offsets = [0, 0], sizes = [8, 32], strides = [1, 1]} : vector<8x128xf32> to vector<8x32xf32>
    %cst_98 = arith.constant 1.000000e+00 : f32
    %336 = vector.broadcast %cst_98 : f32 to vector<8x32xf32>
    %337 = arith.addf %335, %336 : vector<8x32xf32>
    %cst_99 = arith.constant 5.000000e-01 : f32
    %338 = vector.broadcast %cst_99 : f32 to vector<8x32xf32>
    %339 = arith.mulf %338, %337 : vector<8x32xf32>
    %340 = vector.extract_strided_slice %334 {offsets = [0, 32], sizes = [8, 32], strides = [1, 1]} : vector<8x128xf32> to vector<8x32xf32>
    %cst_100 = arith.constant 1.000000e+00 : f32
    %341 = vector.broadcast %cst_100 : f32 to vector<8x32xf32>
    %342 = arith.addf %340, %341 : vector<8x32xf32>
    %cst_101 = arith.constant 5.000000e-01 : f32
    %343 = vector.broadcast %cst_101 : f32 to vector<8x32xf32>
    %344 = arith.mulf %343, %342 : vector<8x32xf32>
    %345 = vector.extract_strided_slice %334 {offsets = [0, 64], sizes = [8, 32], strides = [1, 1]} : vector<8x128xf32> to vector<8x32xf32>
    %346 = vector.extract_strided_slice %334 {offsets = [0, 96], sizes = [8, 32], strides = [1, 1]} : vector<8x128xf32> to vector<8x32xf32>
    %cst_102 = arith.constant 1.000000e+00 : f32
    %347 = vector.broadcast %cst_102 : f32 to vector<8x32xf32>
    %348 = arith.addf %346, %347 : vector<8x32xf32>
    %cst_103 = arith.constant 5.000000e-01 : f32
    %349 = vector.broadcast %cst_103 : f32 to vector<8x32xf32>
    %350 = arith.mulf %349, %348 : vector<8x32xf32>
    %351 = arith.mulf %344, %298 : vector<8x32xf32>
    %352 = arith.mulf %339, %345 : vector<8x32xf32>
    %353 = arith.addf %351, %352 : vector<8x32xf32>
    %354 = math.tanh %353 : vector<8x32xf32>
    %355 = arith.mulf %350, %354 : vector<8x32xf32>
    %356 = arith.truncf %355 : vector<8x32xf32> to vector<8x32xbf16>
    %cst_104 = arith.constant dense<0.000000e+00> : vector<8x128xf32>
    %357 = tpu.matmul %356, %4, %cst_104 {dimension_numbers = #tpu.dot_dimension_numbers<[1], [0], [0], [1], [0, 0, 1, 1], [], []>} : vector<8x32xbf16>, vector<32x128xbf16>, vector<8x128xf32> -> vector<8x128xf32>
    %358 = arith.addf %357, %330 : vector<8x128xf32>
    %359 = math.tanh %358 : vector<8x128xf32>
    %360 = vector.extract_strided_slice %359 {offsets = [0, 0], sizes = [8, 32], strides = [1, 1]} : vector<8x128xf32> to vector<8x32xf32>
    %cst_105 = arith.constant 1.000000e+00 : f32
    %361 = vector.broadcast %cst_105 : f32 to vector<8x32xf32>
    %362 = arith.addf %360, %361 : vector<8x32xf32>
    %cst_106 = arith.constant 5.000000e-01 : f32
    %363 = vector.broadcast %cst_106 : f32 to vector<8x32xf32>
    %364 = arith.mulf %363, %362 : vector<8x32xf32>
    %365 = vector.extract_strided_slice %359 {offsets = [0, 32], sizes = [8, 32], strides = [1, 1]} : vector<8x128xf32> to vector<8x32xf32>
    %cst_107 = arith.constant 1.000000e+00 : f32
    %366 = vector.broadcast %cst_107 : f32 to vector<8x32xf32>
    %367 = arith.addf %365, %366 : vector<8x32xf32>
    %cst_108 = arith.constant 5.000000e-01 : f32
    %368 = vector.broadcast %cst_108 : f32 to vector<8x32xf32>
    %369 = arith.mulf %368, %367 : vector<8x32xf32>
    %370 = vector.extract_strided_slice %359 {offsets = [0, 64], sizes = [8, 32], strides = [1, 1]} : vector<8x128xf32> to vector<8x32xf32>
    %371 = vector.extract_strided_slice %359 {offsets = [0, 96], sizes = [8, 32], strides = [1, 1]} : vector<8x128xf32> to vector<8x32xf32>
    %cst_109 = arith.constant 1.000000e+00 : f32
    %372 = vector.broadcast %cst_109 : f32 to vector<8x32xf32>
    %373 = arith.addf %371, %372 : vector<8x32xf32>
    %cst_110 = arith.constant 5.000000e-01 : f32
    %374 = vector.broadcast %cst_110 : f32 to vector<8x32xf32>
    %375 = arith.mulf %374, %373 : vector<8x32xf32>
    %376 = arith.mulf %369, %323 : vector<8x32xf32>
    %377 = arith.mulf %364, %370 : vector<8x32xf32>
    %378 = arith.addf %376, %377 : vector<8x32xf32>
    %379 = math.tanh %378 : vector<8x32xf32>
    %380 = arith.mulf %375, %379 : vector<8x32xf32>
    %381 = vector.extract_strided_slice %15 {offsets = [56, 0], sizes = [8, 128], strides = [1, 1]} : vector<64x128xf32> to vector<8x128xf32>
    %382 = arith.truncf %380 : vector<8x32xf32> to vector<8x32xbf16>
    %cst_111 = arith.constant dense<0.000000e+00> : vector<8x128xf32>
    %383 = tpu.matmul %382, %6, %cst_111 {dimension_numbers = #tpu.dot_dimension_numbers<[1], [0], [0], [1], [0, 0, 1, 1], [], []>} : vector<8x32xbf16>, vector<32x128xbf16>, vector<8x128xf32> -> vector<8x128xf32>
    %384 = vector.broadcast %9 : vector<1x128xf32> to vector<8x128xf32>
    %385 = arith.addf %383, %384 : vector<8x128xf32>
    %386 = arith.truncf %355 : vector<8x32xf32> to vector<8x32xbf16>
    %cst_112 = arith.constant dense<0.000000e+00> : vector<8x128xf32>
    %387 = tpu.matmul %386, %2, %cst_112 {dimension_numbers = #tpu.dot_dimension_numbers<[1], [0], [0], [1], [0, 0, 1, 1], [], []>} : vector<8x32xbf16>, vector<32x128xbf16>, vector<8x128xf32> -> vector<8x128xf32>
    %388 = arith.addf %381, %387 : vector<8x128xf32>
    %389 = math.tanh %388 : vector<8x128xf32>
    %390 = vector.extract_strided_slice %389 {offsets = [0, 0], sizes = [8, 32], strides = [1, 1]} : vector<8x128xf32> to vector<8x32xf32>
    %cst_113 = arith.constant 1.000000e+00 : f32
    %391 = vector.broadcast %cst_113 : f32 to vector<8x32xf32>
    %392 = arith.addf %390, %391 : vector<8x32xf32>
    %cst_114 = arith.constant 5.000000e-01 : f32
    %393 = vector.broadcast %cst_114 : f32 to vector<8x32xf32>
    %394 = arith.mulf %393, %392 : vector<8x32xf32>
    %395 = vector.extract_strided_slice %389 {offsets = [0, 32], sizes = [8, 32], strides = [1, 1]} : vector<8x128xf32> to vector<8x32xf32>
    %cst_115 = arith.constant 1.000000e+00 : f32
    %396 = vector.broadcast %cst_115 : f32 to vector<8x32xf32>
    %397 = arith.addf %395, %396 : vector<8x32xf32>
    %cst_116 = arith.constant 5.000000e-01 : f32
    %398 = vector.broadcast %cst_116 : f32 to vector<8x32xf32>
    %399 = arith.mulf %398, %397 : vector<8x32xf32>
    %400 = vector.extract_strided_slice %389 {offsets = [0, 64], sizes = [8, 32], strides = [1, 1]} : vector<8x128xf32> to vector<8x32xf32>
    %401 = vector.extract_strided_slice %389 {offsets = [0, 96], sizes = [8, 32], strides = [1, 1]} : vector<8x128xf32> to vector<8x32xf32>
    %cst_117 = arith.constant 1.000000e+00 : f32
    %402 = vector.broadcast %cst_117 : f32 to vector<8x32xf32>
    %403 = arith.addf %401, %402 : vector<8x32xf32>
    %cst_118 = arith.constant 5.000000e-01 : f32
    %404 = vector.broadcast %cst_118 : f32 to vector<8x32xf32>
    %405 = arith.mulf %404, %403 : vector<8x32xf32>
    %406 = arith.mulf %399, %353 : vector<8x32xf32>
    %407 = arith.mulf %394, %400 : vector<8x32xf32>
    %408 = arith.addf %406, %407 : vector<8x32xf32>
    %409 = math.tanh %408 : vector<8x32xf32>
    %410 = arith.mulf %405, %409 : vector<8x32xf32>
    %411 = arith.truncf %410 : vector<8x32xf32> to vector<8x32xbf16>
    %cst_119 = arith.constant dense<0.000000e+00> : vector<8x128xf32>
    %412 = tpu.matmul %411, %4, %cst_119 {dimension_numbers = #tpu.dot_dimension_numbers<[1], [0], [0], [1], [0, 0, 1, 1], [], []>} : vector<8x32xbf16>, vector<32x128xbf16>, vector<8x128xf32> -> vector<8x128xf32>
    %413 = arith.addf %412, %385 : vector<8x128xf32>
    %414 = math.tanh %413 : vector<8x128xf32>
    %415 = vector.extract_strided_slice %414 {offsets = [0, 0], sizes = [8, 32], strides = [1, 1]} : vector<8x128xf32> to vector<8x32xf32>
    %cst_120 = arith.constant 1.000000e+00 : f32
    %416 = vector.broadcast %cst_120 : f32 to vector<8x32xf32>
    %417 = arith.addf %415, %416 : vector<8x32xf32>
    %cst_121 = arith.constant 5.000000e-01 : f32
    %418 = vector.broadcast %cst_121 : f32 to vector<8x32xf32>
    %419 = arith.mulf %418, %417 : vector<8x32xf32>
    %420 = vector.extract_strided_slice %414 {offsets = [0, 32], sizes = [8, 32], strides = [1, 1]} : vector<8x128xf32> to vector<8x32xf32>
    %cst_122 = arith.constant 1.000000e+00 : f32
    %421 = vector.broadcast %cst_122 : f32 to vector<8x32xf32>
    %422 = arith.addf %420, %421 : vector<8x32xf32>
    %cst_123 = arith.constant 5.000000e-01 : f32
    %423 = vector.broadcast %cst_123 : f32 to vector<8x32xf32>
    %424 = arith.mulf %423, %422 : vector<8x32xf32>
    %425 = vector.extract_strided_slice %414 {offsets = [0, 64], sizes = [8, 32], strides = [1, 1]} : vector<8x128xf32> to vector<8x32xf32>
    %426 = vector.extract_strided_slice %414 {offsets = [0, 96], sizes = [8, 32], strides = [1, 1]} : vector<8x128xf32> to vector<8x32xf32>
    %cst_124 = arith.constant 1.000000e+00 : f32
    %427 = vector.broadcast %cst_124 : f32 to vector<8x32xf32>
    %428 = arith.addf %426, %427 : vector<8x32xf32>
    %cst_125 = arith.constant 5.000000e-01 : f32
    %429 = vector.broadcast %cst_125 : f32 to vector<8x32xf32>
    %430 = arith.mulf %429, %428 : vector<8x32xf32>
    %431 = arith.mulf %424, %378 : vector<8x32xf32>
    %432 = arith.mulf %419, %425 : vector<8x32xf32>
    %433 = arith.addf %431, %432 : vector<8x32xf32>
    %434 = math.tanh %433 : vector<8x32xf32>
    %435 = arith.mulf %430, %434 : vector<8x32xf32>
    %cst_126 = arith.constant dense<0.000000e+00> : vector<8x128xf32>
    %436 = tpu.matmul %435, %7, %cst_126 {dimension_numbers = #tpu.dot_dimension_numbers<[1], [0], [0], [1], [0, 0, 1, 1], [], []>} : vector<8x32xf32>, vector<32x128xf32>, vector<8x128xf32> -> vector<8x128xf32>
    %437 = vector.broadcast %10 : vector<1x128xf32> to vector<8x128xf32>
    %438 = arith.addf %436, %437 : vector<8x128xf32>
    %439 = vector.extract_strided_slice %438 {offsets = [0, 0], sizes = [8, 32], strides = [1, 1]} : vector<8x128xf32> to vector<8x32xf32>
    %440 = vector.extract_strided_slice %438 {offsets = [0, 32], sizes = [8, 32], strides = [1, 1]} : vector<8x128xf32> to vector<8x32xf32>
    %c0_127 = arith.constant 0 : index
    %c0_128 = arith.constant 0 : index
    %441 = vector.load %arg3[%c0_127, %c0_128] : memref<8x128xf32, #tpu.memory_space<vmem>>, vector<8x128xf32>
    tpu.vector_store %arg3[%c0_127, %c0_128], %438 {strides = array<i32>} : memref<8x128xf32, #tpu.memory_space<vmem>>, vector<8x128xf32>,
    %442 = math.exp %440 : vector<8x32xf32>
    %443 = arith.mulf %442, %11 : vector<8x32xf32>
    %444 = arith.addf %439, %443 : vector<8x32xf32>
    %c0_129 = arith.constant 0 : index
    %c64 = arith.constant 64 : index
    %445 = vector.load %arg3[%c0_129, %c64] : memref<8x128xf32, #tpu.memory_space<vmem>>, vector<8x32xf32>
    tpu.vector_store %arg3[%c0_129, %c64], %444 {strides = array<i32>} : memref<8x128xf32, #tpu.memory_space<vmem>>, vector<8x32xf32>,
    return
  }
}

</mosaic_0001>

<llo_original>
// kernel: bencoder_forward.1
$region0: #{bencoder_forward.1}
  #allocation0 [shape = 'u32[]', space=smem, size = 0x4, offset = 0x4, fixed_abs, tag = 'smem constant byte address 0x4 - core index']
  #allocation1 [shape = 'u32[144,128]{1,0:T(1,128)}', space=vmem, size = 0x12000, scoped, tag = 'internal scratch']
  %s0 = inlined_call_operand.vmem [shape: f32[64,16], index: 0, kind: input, shape index: {}]
  %s1 = inlined_call_operand.vmem [shape: f32[144,128], index: 1, kind: input, shape index: {}]
  %s2 = inlined_call_operand.vmem [shape: f32[16,128], index: 2, kind: input, shape index: {}]
  %s3 = inlined_call_operand.vmem [shape: f32[8,128], index: 3, kind: output, shape index: {}]
  %s4 = sld [smem:[#allocation0]]
  $region22: #{bencoder_forward.1} parent=0
    _
  %s6 = ssub.s32 1, %s4
  %s7 = scalar_select 0, %s6, %s4
  // Predicated region
  $region2: #{bencoder_forward.1} parent=0 // pred_check
    _
  $region3: #{bencoder_forward.1} parent=0 // pred_check_branch
    %9 = sbr.rel (0) target = $region5
  $region4: #{bencoder_forward.1} parent=0 // pred_region
    _
  $region5: #{bencoder_forward.1} parent=0 // pred_fallthru
    _
  // Predicated region
  $region6: #{bencoder_forward.1} parent=0 // pred_check
    _
  $region7: #{bencoder_forward.1} parent=0 // pred_check_branch
    %11 = sbr.rel (0) target = $region9
  $region8: #{bencoder_forward.1} parent=0 // pred_region
    _
  $region9: #{bencoder_forward.1} parent=0 // pred_fallthru
    _
  // Predicated region
  $region10: #{bencoder_forward.1} parent=0 // pred_check
    _
  $region11: #{bencoder_forward.1} parent=0 // pred_check_branch
    %13 = sbr.rel (0) target = $region13
  $region12: #{bencoder_forward.1} parent=0 // pred_region
    _
  $region13: #{bencoder_forward.1} parent=0 // pred_fallthru
    _
  %v15 = vld [vmem:[%s1] sm:$0xff]
  %v16 = vld [vmem:[%s1 + $0x8] sm:$0xff]
  %v17 = vld [vmem:[%s1 + $0x10] sm:$0xff]
  %v18 = vld [vmem:[%s1 + $0x18] sm:$0xff]
  %v19 = vld [vmem:[%s1 + $0x20] sm:$0xff]
  %v20 = vld [vmem:[%s1 + $0x28] sm:$0xff]
  %v21 = vpack.c.bf16 %v18, %v17
  %v22 = vpack.c.bf16 %v20, %v19
  %v23 = vld [vmem:[%s1 + $0x30] sm:$0xff]
  %v24 = vld [vmem:[%s1 + $0x38] sm:$0xff]
  %v25 = vld [vmem:[%s1 + $0x40] sm:$0xff]
  %v26 = vld [vmem:[%s1 + $0x48] sm:$0xff]
  %v27 = vpack.c.bf16 %v24, %v23
  %v28 = vpack.c.bf16 %v26, %v25
  %v29 = vld [vmem:[%s1 + $0x50] sm:$0xff]
  %v30 = vld [vmem:[%s1 + $0x58] sm:$0xff]
  %v31 = vld [vmem:[%s1 + $0x60] sm:$0xff]
  %v32 = vld [vmem:[%s1 + $0x68] sm:$0xff]
  %v33 = vpack.c.bf16 %v30, %v29
  %v34 = vpack.c.bf16 %v32, %v31
  %v35 = vld [vmem:[%s1 + $0x70] sm:$0xff]
  %v36 = vld [vmem:[%s1 + $0x78] sm:$0xff]
  %v37 = vld [vmem:[%s1 + $0x80] sm:$0xff]
  %v38 = vld [vmem:[%s1 + $0x88] sm:$0xff]
  %v39 = vld [vmem:[%s2] sm:$0x1]
  %v40 = vld [vmem:[%s2 + $0x1] sm:$0x1]
  %v41 = vld [vmem:[%s2 + $0x2] sm:$0x1]
  %v42 = vld [vmem:[%s2 + $0x8] sm:$0xff]
  %v43 = vld [vmem:[%s0] sm:$0xff]
  %v44 = vld [vmem:[%s0 + $0x8] sm:$0xff]
  %v45 = vld [vmem:[%s0 + $0x10] sm:$0xff]
  %v46 = vld [vmem:[%s0 + $0x18] sm:$0xff]
  %v47 = vld [vmem:[%s0 + $0x20] sm:$0xff]
  %v48 = vld [vmem:[%s0 + $0x28] sm:$0xff]
  %v49 = vld [vmem:[%s0 + $0x30] sm:$0xff]
  %v50 = vld [vmem:[%s0 + $0x38] sm:$0xff]
  %v51 = vlaneseq
  %v52 = vshrl.u32 %v51, 7
  %v53 = vsub.s32 0, %v52
  %v54 = vrot.slane %v39, %v53
  %vm55 = vcmask 130048
  %v57 = vsel %vm55, %v43, 0
  %v60 = vsel %vm55, %v44, 0
  %v63 = vsel %vm55, %v45, 0
  %v66 = vsel %vm55, %v46, 0
  %v69 = vsel %vm55, %v47, 0
  %v72 = vsel %vm55, %v48, 0
  %v75 = vsel %vm55, %v49, 0
  %v78 = vsel %vm55, %v50, 0
  %80 = vmatprep.subr.mxu0 0.0
  %81 = vmatpush1.msra.mxu0 %v15
  %82 = vmatprep.subr.mxu0 0.0
  %83 = vmatpush1.msra.mxu0 %v16
  %84 = vmatprep.subr.mxu0 0.0
  %85 = vmatpush1.msra.mxu0 0.0
  %86 = vmatprep.subr.mxu0 0.0
  %87 = vmatpush1.msra.mxu0 0.0
  %88 = vmatprep.subr.mxu0 0.0
  %89 = vmatpush1.msra.mxu0 0.0
  %90 = vmatprep.subr.mxu0 0.0
  %91 = vmatpush1.msra.mxu0 0.0
  %92 = vmatprep.subr.mxu0 0.0
  %93 = vmatpush1.msra.mxu0 0.0
  %94 = vmatprep.subr.mxu0 0.0
  %95 = vmatpush1.msra.mxu0 0.0
  %96 = vmatprep.subr.mxu0 0.0
  %97 = vmatpush1.msra.mxu0 0.0
  %98 = vmatprep.subr.mxu0 0.0
  %99 = vmatpush1.msra.mxu0 0.0
  %100 = vmatprep.subr.mxu0 0.0
  %101 = vmatpush1.msra.mxu0 0.0
  %102 = vmatprep.subr.mxu0 0.0
  %103 = vmatpush1.msra.mxu0 0.0
  %104 = vmatprep.subr.mxu0 0.0
  %105 = vmatpush1.msra.mxu0 0.0
  %106 = vmatprep.subr.mxu0 0.0
  %107 = vmatpush1.msra.mxu0 0.0
  %108 = vmatprep.subr.mxu0 0.0
  %109 = vmatpush1.msra.mxu0 0.0
  %110 = vmatprep.subr.mxu0 0.0
  %111 = vmatpush1.msra.mxu0 0.0
  %112 = vmatprep.subr.mxu0 0.0
  %113 = vmatpush1.msra.mxu0 0.0
  %114 = vmatprep.subr.mxu0 0.0
  %115 = vmatpush1.msra.mxu0 0.0
  %116 = vmatprep.subr.mxu0 0.0
  %117 = vmatpush1.msra.mxu0 0.0
  %118 = vmatprep.subr.mxu0 0.0
  %119 = vmatpush1.msra.mxu0 0.0
  %120 = vmatprep.subr.mxu0 0.0
  %121 = vmatpush1.msra.mxu0 0.0
  %122 = vmatprep.subr.mxu0 0.0
  %123 = vmatpush1.msra.mxu0 0.0
  %124 = vmatprep.subr.mxu0 0.0
  %125 = vmatpush1.msra.mxu0 0.0
  %126 = vmatprep.subr.mxu0 0.0
  %127 = vmatpush1.msra.mxu0 0.0
  %128 = vmatprep.subr.mxu0 0.0
  %129 = vmatpush1.msra.mxu0 0.0
  %130 = vmatprep.subr.mxu0 0.0
  %131 = vmatpush1.msra.mxu0 0.0
  %132 = vmatprep.subr.mxu0 0.0
  %133 = vmatpush1.msra.mxu0 0.0
  %134 = vmatprep.subr.mxu0 0.0
  %135 = vmatpush1.msra.mxu0 0.0
  %136 = vmatprep.subr.mxu0 0.0
  %137 = vmatpush1.msra.mxu0 0.0
  %138 = vmatprep.subr.mxu0 0.0
  %139 = vmatpush1.msra.mxu0 0.0
  %140 = vmatprep.subr.mxu0 0.0
  %141 = vmatpush1.msra.mxu0 0.0
  %142 = vmatprep.subr.mxu0 0.0
  %143 = vmatpush1.msra.mxu0 0.0
  %144 = vmatprep.mubr.f32.mxu0 0.0
  %145 = vmatmul.mubr.f32.gmra.mrb[0].mxu0 %v57
  %v146 = vpop.f32.mrb[0].mxu0
  %v147 = vadd.f32 %v54, %v146
  %v148 = vpop.f32.mrb[0].mxu0
  %149 = vmatprep.mubr.f32.mxu0 0.0
  %150 = vmatmul.mubr.f32.gmra.mrb[0].mxu0 %v60
  %v151 = vpop.f32.mrb[0].mxu0
  %v152 = vadd.f32 %v54, %v151
  %v153 = vpop.f32.mrb[0].mxu0
  %154 = vmatprep.mubr.f32.mxu0 0.0
  %155 = vmatmul.mubr.f32.gmra.mrb[0].mxu0 %v63
  %v156 = vpop.f32.mrb[0].mxu0
  %v157 = vadd.f32 %v54, %v156
  %v158 = vpop.f32.mrb[0].mxu0
  %159 = vmatprep.mubr.f32.mxu0 0.0
  %160 = vmatmul.mubr.f32.gmra.mrb[0].mxu0 %v66
  %v161 = vpop.f32.mrb[0].mxu0
  %v162 = vadd.f32 %v54, %v161
  %v163 = vpop.f32.mrb[0].mxu0
  %164 = vmatprep.mubr.f32.mxu0 0.0
  %165 = vmatmul.mubr.f32.gmra.mrb[0].mxu0 %v69
  %v166 = vpop.f32.mrb[0].mxu0
  %v167 = vadd.f32 %v54, %v166
  %v168 = vpop.f32.mrb[0].mxu0
  %169 = vmatprep.mubr.f32.mxu0 0.0
  %170 = vmatmul.mubr.f32.gmra.mrb[0].mxu0 %v72
  %v171 = vpop.f32.mrb[0].mxu0
  %v172 = vadd.f32 %v54, %v171
  %v173 = vpop.f32.mrb[0].mxu0
  %174 = vmatprep.mubr.f32.mxu0 0.0
  %175 = vmatmul.mubr.f32.gmra.mrb[0].mxu0 %v75
  %v176 = vpop.f32.mrb[0].mxu0
  %v177 = vadd.f32 %v54, %v176
  %v178 = vpop.f32.mrb[0].mxu0
  %179 = vmatprep.mubr.f32.mxu0 0.0
  %180 = vmatmul.mubr.f32.gmra.mrb[0].mxu0 %v78
  %v181 = vpop.f32.mrb[0].mxu0
  %v182 = vadd.f32 %v54, %v181
  %v183 = vpop.f32.mrb[0].mxu0
  %184 = vdwg.mxu0
  %v185 = vtanh.pop %v147
  %v186 = vadd.f32 %v185, 1.0
  %v187 = vmul.f32 %v186, 0.5
  %189 = vrot.lane.b32.xlu0 %v185, 64
  %v190 = vpop.permute.xlu0 %189
  %v192 = vmul.f32 %v187, %v190
  %v193 = vtanh.pop %v192
  %195 = vrot.lane.b32.xlu0 %v193, 96
  %v196 = vpop.permute.xlu0 %195
  %v198 = vmul.f32 %v187, %v196
  %v199 = vpack.c.bf16 %v198, %v198
  %v200 = vlaneseq
  %v201 = vshrl.u32 %v200, 7
  %v202 = vsub.s32 0, %v201
  %v203 = vrot.slane %v40, %v202
  %205 = vrot.lane.b32.xlu0 %v199, 32
  %v206 = vpop.permute.xlu0 %205
  %vm207 = vcmask 261120
  %v209 = vsel %vm207, %v206, 0
  %211 = vmatprep.subr.bf16.mxu0 0
  %212 = vmatpush1.bf16.msra.mxu0 %v27
  %213 = vmatprep.subr.bf16.mxu0 0
  %214 = vmatpush1.bf16.msra.mxu0 %v28
  %215 = vmatprep.subr.bf16.mxu0 0
  %216 = vmatpush1.bf16.msra.mxu0 0
  %217 = vmatprep.subr.bf16.mxu0 0
  %218 = vmatpush1.bf16.msra.mxu0 0
  %219 = vmatprep.subr.bf16.mxu0 0
  %220 = vmatpush1.bf16.msra.mxu0 0
  %221 = vmatprep.subr.bf16.mxu0 0
  %222 = vmatpush1.bf16.msra.mxu0 0
  %223 = vmatprep.subr.bf16.mxu0 0
  %224 = vmatpush1.bf16.msra.mxu0 0
  %225 = vmatprep.subr.bf16.mxu0 0
  %226 = vmatpush1.bf16.msra.mxu0 0
  %227 = vmatprep.subr.bf16.mxu0 0
  %228 = vmatpush1.bf16.msra.mxu0 0
  %229 = vmatprep.subr.bf16.mxu0 0
  %230 = vmatpush1.bf16.msra.mxu0 0
  %231 = vmatprep.subr.bf16.mxu0 0
  %232 = vmatpush1.bf16.msra.mxu0 0
  %233 = vmatprep.subr.bf16.mxu0 0
  %234 = vmatpush1.bf16.msra.mxu0 0
  %235 = vmatprep.subr.bf16.mxu0 0
  %236 = vmatpush1.bf16.msra.mxu0 0
  %237 = vmatprep.subr.bf16.mxu0 0
  %238 = vmatpush1.bf16.msra.mxu0 0
  %239 = vmatprep.subr.bf16.mxu0 0
  %240 = vmatpush1.bf16.msra.mxu0 0
  %241 = vmatprep.subr.bf16.mxu0 0
  %242 = vmatpush1.bf16.msra.mxu0 0
  %243 = vmatprep.mubr.bf16.mxu0 0
  %244 = vmatmul.mubr.bf16.gmra.mrb[0].mxu0 %v209
  %v245 = vpop.f32.mrb[0].mxu0
  %v246 = vadd.f32 %v203, %v245
  %v247 = vpop.f32.mrb[0].mxu0
  %v248 = vpop.f32.mrb[0].mxu0
  %v249 = vpop.f32.mrb[0].mxu0
  %250 = vdwg.mxu0
  %v251 = vtanh.pop %v246
  %v252 = vadd.f32 %v251, 1.0
  %v253 = vmul.f32 %v252, 0.5
  %255 = vrot.lane.b32.xlu0 %v251, 64
  %v256 = vpop.permute.xlu0 %255
  %v258 = vmul.f32 %v253, %v256
  %v259 = vtanh.pop %v258
  %261 = vrot.lane.b32.xlu0 %v259, 96
  %v262 = vpop.permute.xlu0 %261
  %v264 = vmul.f32 %v253, %v262
  %v265 = vpack.c.bf16 %v264, %v264
  %267 = vrot.lane.b32.xlu0 %v265, 32
  %v268 = vpop.permute.xlu0 %267
  %v270 = vsel %vm207, %v268, 0
  %272 = vmatprep.subr.bf16.mxu0 0
  %273 = vmatpush1.bf16.msra.mxu0 %v33
  %274 = vmatprep.subr.bf16.mxu0 0
  %275 = vmatpush1.bf16.msra.mxu0 %v34
  %276 = vmatprep.subr.bf16.mxu0 0
  %277 = vmatpush1.bf16.msra.mxu0 0
  %278 = vmatprep.subr.bf16.mxu0 0
  %279 = vmatpush1.bf16.msra.mxu0 0
  %280 = vmatprep.subr.bf16.mxu0 0
  %281 = vmatpush1.bf16.msra.mxu0 0
  %282 = vmatprep.subr.bf16.mxu0 0
  %283 = vmatpush1.bf16.msra.mxu0 0
  %284 = vmatprep.subr.bf16.mxu0 0
  %285 = vmatpush1.bf16.msra.mxu0 0
  %286 = vmatprep.subr.bf16.mxu0 0
  %287 = vmatpush1.bf16.msra.mxu0 0
  %288 = vmatprep.subr.bf16.mxu0 0
  %289 = vmatpush1.bf16.msra.mxu0 0
  %290 = vmatprep.subr.bf16.mxu0 0
  %291 = vmatpush1.bf16.msra.mxu0 0
  %292 = vmatprep.subr.bf16.mxu0 0
  %293 = vmatpush1.bf16.msra.mxu0 0
  %294 = vmatprep.subr.bf16.mxu0 0
  %295 = vmatpush1.bf16.msra.mxu0 0
  %296 = vmatprep.subr.bf16.mxu0 0
  %297 = vmatpush1.bf16.msra.mxu0 0
  %298 = vmatprep.subr.bf16.mxu0 0
  %299 = vmatpush1.bf16.msra.mxu0 0
  %300 = vmatprep.subr.bf16.mxu0 0
  %301 = vmatpush1.bf16.msra.mxu0 0
  %302 = vmatprep.subr.bf16.mxu0 0
  %303 = vmatpush1.bf16.msra.mxu0 0
  %304 = vmatprep.mubr.bf16.mxu0 0
  %305 = vmatmul.mubr.bf16.gmra.mrb[0].mxu0 %v270
  %v306 = vpop.f32.mrb[0].mxu0
  %v307 = vadd.f32 %v203, %v306
  %v308 = vpop.f32.mrb[0].mxu0
  %v309 = vpop.f32.mrb[0].mxu0
  %v310 = vpop.f32.mrb[0].mxu0
  %311 = vdwg.mxu0
  %312 = vmatprep.subr.bf16.mxu0 0
  %313 = vmatpush1.bf16.msra.mxu0 %v21
  %314 = vmatprep.subr.bf16.mxu0 0
  %315 = vmatpush1.bf16.msra.mxu0 %v22
  %316 = vmatprep.subr.bf16.mxu0 0
  %317 = vmatpush1.bf16.msra.mxu0 0
  %318 = vmatprep.subr.bf16.mxu0 0
  %319 = vmatpush1.bf16.msra.mxu0 0
  %320 = vmatprep.subr.bf16.mxu0 0
  %321 = vmatpush1.bf16.msra.mxu0 0
  %322 = vmatprep.subr.bf16.mxu0 0
  %323 = vmatpush1.bf16.msra.mxu0 0
  %324 = vmatprep.subr.bf16.mxu0 0
  %325 = vmatpush1.bf16.msra.mxu0 0
  %326 = vmatprep.subr.bf16.mxu0 0
  %327 = vmatpush1.bf16.msra.mxu0 0
  %328 = vmatprep.subr.bf16.mxu0 0
  %329 = vmatpush1.bf16.msra.mxu0 0
  %330 = vmatprep.subr.bf16.mxu0 0
  %331 = vmatpush1.bf16.msra.mxu0 0
  %332 = vmatprep.subr.bf16.mxu0 0
  %333 = vmatpush1.bf16.msra.mxu0 0
  %334 = vmatprep.subr.bf16.mxu0 0
  %335 = vmatpush1.bf16.msra.mxu0 0
  %336 = vmatprep.subr.bf16.mxu0 0
  %337 = vmatpush1.bf16.msra.mxu0 0
  %338 = vmatprep.subr.bf16.mxu0 0
  %339 = vmatpush1.bf16.msra.mxu0 0
  %340 = vmatprep.subr.bf16.mxu0 0
  %341 = vmatpush1.bf16.msra.mxu0 0
  %342 = vmatprep.subr.bf16.mxu0 0
  %343 = vmatpush1.bf16.msra.mxu0 0
  %344 = vmatprep.mubr.bf16.mxu0 0
  %345 = vmatmul.mubr.bf16.gmra.mrb[0].mxu0 %v209
  %v346 = vpop.f32.mrb[0].mxu0
  %v347 = vadd.f32 0.0, %v346
  %v348 = vpop.f32.mrb[0].mxu0
  %v349 = vpop.f32.mrb[0].mxu0
  %v350 = vpop.f32.mrb[0].mxu0
  %351 = vdwg.mxu0
  %v352 = vadd.f32 %v152, %v347
  %v353 = vtanh.pop %v352
  %v354 = vadd.f32 %v353, 1.0
  %v355 = vmul.f32 %v354, 0.5
  %357 = vrot.lane.b32.xlu0 %v192, 32
  %v358 = vpop.permute.xlu0 %357
  %v360 = vmul.f32 %v355, %v358
  %362 = vrot.lane.b32.xlu0 %v353, 64
  %v363 = vpop.permute.xlu0 %362
  %v365 = vmul.f32 %v355, %v363
  %367 = vrot.lane.b32.xlu0 %v365, 32
  %v368 = vpop.permute.xlu0 %367
  %v370 = vadd.f32 %v360, %v368
  %v371 = vtanh.pop %v370
  %373 = vrot.lane.b32.xlu0 %v371, 64
  %v374 = vpop.permute.xlu0 %373
  %v376 = vmul.f32 %v355, %v374
  %v377 = vpack.c.bf16 %v376, %v376
  %379 = vrot.lane.b32.xlu0 %v377, 32
  %v380 = vpop.permute.xlu0 %379
  %v382 = vsel %vm207, %v380, 0
  %384 = vmatprep.subr.bf16.mxu0 0
  %385 = vmatpush1.bf16.msra.mxu0 %v27
  %386 = vmatprep.subr.bf16.mxu0 0
  %387 = vmatpush1.bf16.msra.mxu0 %v28
  %388 = vmatprep.subr.bf16.mxu0 0
  %389 = vmatpush1.bf16.msra.mxu0 0
  %390 = vmatprep.subr.bf16.mxu0 0
  %391 = vmatpush1.bf16.msra.mxu0 0
  %392 = vmatprep.subr.bf16.mxu0 0
  %393 = vmatpush1.bf16.msra.mxu0 0
  %394 = vmatprep.subr.bf16.mxu0 0
  %395 = vmatpush1.bf16.msra.mxu0 0
  %396 = vmatprep.subr.bf16.mxu0 0
  %397 = vmatpush1.bf16.msra.mxu0 0
  %398 = vmatprep.subr.bf16.mxu0 0
  %399 = vmatpush1.bf16.msra.mxu0 0
  %400 = vmatprep.subr.bf16.mxu0 0
  %401 = vmatpush1.bf16.msra.mxu0 0
  %402 = vmatprep.subr.bf16.mxu0 0
  %403 = vmatpush1.bf16.msra.mxu0 0
  %404 = vmatprep.subr.bf16.mxu0 0
  %405 = vmatpush1.bf16.msra.mxu0 0
  %406 = vmatprep.subr.bf16.mxu0 0
  %407 = vmatpush1.bf16.msra.mxu0 0
  %408 = vmatprep.subr.bf16.mxu0 0
  %409 = vmatpush1.bf16.msra.mxu0 0
  %410 = vmatprep.subr.bf16.mxu0 0
  %411 = vmatpush1.bf16.msra.mxu0 0
  %412 = vmatprep.subr.bf16.mxu0 0
  %413 = vmatpush1.bf16.msra.mxu0 0
  %414 = vmatprep.subr.bf16.mxu0 0
  %415 = vmatpush1.bf16.msra.mxu0 0
  %416 = vmatprep.mubr.bf16.mxu0 0
  %417 = vmatmul.mubr.bf16.gmra.mrb[0].mxu0 %v382
  %v418 = vpop.f32.mrb[0].mxu0
  %v419 = vadd.f32 %v307, %v418
  %v420 = vpop.f32.mrb[0].mxu0
  %v421 = vpop.f32.mrb[0].mxu0
  %v422 = vpop.f32.mrb[0].mxu0
  %423 = vdwg.mxu0
  %v424 = vtanh.pop %v419
  %v425 = vadd.f32 %v424, 1.0
  %v426 = vmul.f32 %v425, 0.5
  %428 = vrot.lane.b32.xlu0 %v258, 32
  %v429 = vpop.permute.xlu0 %428
  %v431 = vmul.f32 %v426, %v429
  %433 = vrot.lane.b32.xlu0 %v424, 64
  %v434 = vpop.permute.xlu0 %433
  %v436 = vmul.f32 %v426, %v434
  %438 = vrot.lane.b32.xlu0 %v436, 32
  %v439 = vpop.permute.xlu0 %438
  %v441 = vadd.f32 %v431, %v439
  %v442 = vtanh.pop %v441
  %444 = vrot.lane.b32.xlu0 %v442, 64
  %v445 = vpop.permute.xlu0 %444
  %v447 = vmul.f32 %v426, %v445
  %v448 = vpack.c.bf16 %v447, %v447
  %450 = vrot.lane.b32.xlu0 %v448, 32
  %v451 = vpop.permute.xlu0 %450
  %v453 = vsel %vm207, %v451, 0
  %455 = vmatprep.subr.bf16.mxu0 0
  %456 = vmatpush1.bf16.msra.mxu0 %v33
  %457 = vmatprep.subr.bf16.mxu0 0
  %458 = vmatpush1.bf16.msra.mxu0 %v34
  %459 = vmatprep.subr.bf16.mxu0 0
  %460 = vmatpush1.bf16.msra.mxu0 0
  %461 = vmatprep.subr.bf16.mxu0 0
  %462 = vmatpush1.bf16.msra.mxu0 0
  %463 = vmatprep.subr.bf16.mxu0 0
  %464 = vmatpush1.bf16.msra.mxu0 0
  %465 = vmatprep.subr.bf16.mxu0 0
  %466 = vmatpush1.bf16.msra.mxu0 0
  %467 = vmatprep.subr.bf16.mxu0 0
  %468 = vmatpush1.bf16.msra.mxu0 0
  %469 = vmatprep.subr.bf16.mxu0 0
  %470 = vmatpush1.bf16.msra.mxu0 0
  %471 = vmatprep.subr.bf16.mxu0 0
  %472 = vmatpush1.bf16.msra.mxu0 0
  %473 = vmatprep.subr.bf16.mxu0 0
  %474 = vmatpush1.bf16.msra.mxu0 0
  %475 = vmatprep.subr.bf16.mxu0 0
  %476 = vmatpush1.bf16.msra.mxu0 0
  %477 = vmatprep.subr.bf16.mxu0 0
  %478 = vmatpush1.bf16.msra.mxu0 0
  %479 = vmatprep.subr.bf16.mxu0 0
  %480 = vmatpush1.bf16.msra.mxu0 0
  %481 = vmatprep.subr.bf16.mxu0 0
  %482 = vmatpush1.bf16.msra.mxu0 0
  %483 = vmatprep.subr.bf16.mxu0 0
  %484 = vmatpush1.bf16.msra.mxu0 0
  %485 = vmatprep.subr.bf16.mxu0 0
  %486 = vmatpush1.bf16.msra.mxu0 0
  %487 = vmatprep.mubr.bf16.mxu0 0
  %488 = vmatmul.mubr.bf16.gmra.mrb[0].mxu0 %v453
  %v489 = vpop.f32.mrb[0].mxu0
  %v490 = vadd.f32 %v203, %v489
  %v491 = vpop.f32.mrb[0].mxu0
  %v492 = vpop.f32.mrb[0].mxu0
  %v493 = vpop.f32.mrb[0].mxu0
  %494 = vdwg.mxu0
  %495 = vmatprep.subr.bf16.mxu0 0
  %496 = vmatpush1.bf16.msra.mxu0 %v21
  %497 = vmatprep.subr.bf16.mxu0 0
  %498 = vmatpush1.bf16.msra.mxu0 %v22
  %499 = vmatprep.subr.bf16.mxu0 0
  %500 = vmatpush1.bf16.msra.mxu0 0
  %501 = vmatprep.subr.bf16.mxu0 0
  %502 = vmatpush1.bf16.msra.mxu0 0
  %503 = vmatprep.subr.bf16.mxu0 0
  %504 = vmatpush1.bf16.msra.mxu0 0
  %505 = vmatprep.subr.bf16.mxu0 0
  %506 = vmatpush1.bf16.msra.mxu0 0
  %507 = vmatprep.subr.bf16.mxu0 0
  %508 = vmatpush1.bf16.msra.mxu0 0
  %509 = vmatprep.subr.bf16.mxu0 0
  %510 = vmatpush1.bf16.msra.mxu0 0
  %511 = vmatprep.subr.bf16.mxu0 0
  %512 = vmatpush1.bf16.msra.mxu0 0
  %513 = vmatprep.subr.bf16.mxu0 0
  %514 = vmatpush1.bf16.msra.mxu0 0
  %515 = vmatprep.subr.bf16.mxu0 0
  %516 = vmatpush1.bf16.msra.mxu0 0
  %517 = vmatprep.subr.bf16.mxu0 0
  %518 = vmatpush1.bf16.msra.mxu0 0
  %519 = vmatprep.subr.bf16.mxu0 0
  %520 = vmatpush1.bf16.msra.mxu0 0
  %521 = vmatprep.subr.bf16.mxu0 0
  %522 = vmatpush1.bf16.msra.mxu0 0
  %523 = vmatprep.subr.bf16.mxu0 0
  %524 = vmatpush1.bf16.msra.mxu0 0
  %525 = vmatprep.subr.bf16.mxu0 0
  %526 = vmatpush1.bf16.msra.mxu0 0
  %527 = vmatprep.mubr.bf16.mxu0 0
  %528 = vmatmul.mubr.bf16.gmra.mrb[0].mxu0 %v382
  %v529 = vpop.f32.mrb[0].mxu0
  %v530 = vadd.f32 0.0, %v529
  %v531 = vpop.f32.mrb[0].mxu0
  %v532 = vpop.f32.mrb[0].mxu0
  %v533 = vpop.f32.mrb[0].mxu0
  %534 = vdwg.mxu0
  %v535 = vadd.f32 %v157, %v530
  %v536 = vtanh.pop %v535
  %v537 = vadd.f32 %v536, 1.0
  %v538 = vmul.f32 %v537, 0.5
  %v539 = vmul.f32 %v538, %v370
  %541 = vrot.lane.b32.xlu0 %v536, 64
  %v542 = vpop.permute.xlu0 %541
  %v544 = vmul.f32 %v538, %v542
  %546 = vrot.lane.b32.xlu0 %v544, 32
  %v547 = vpop.permute.xlu0 %546
  %v549 = vadd.f32 %v539, %v547
  %v550 = vtanh.pop %v549
  %552 = vrot.lane.b32.xlu0 %v550, 64
  %v553 = vpop.permute.xlu0 %552
  %v555 = vmul.f32 %v538, %v553
  %v556 = vpack.c.bf16 %v555, %v555
  %558 = vrot.lane.b32.xlu0 %v556, 32
  %v559 = vpop.permute.xlu0 %558
  %v561 = vsel %vm207, %v559, 0
  %563 = vmatprep.subr.bf16.mxu0 0
  %564 = vmatpush1.bf16.msra.mxu0 %v27
  %565 = vmatprep.subr.bf16.mxu0 0
  %566 = vmatpush1.bf16.msra.mxu0 %v28
  %567 = vmatprep.subr.bf16.mxu0 0
  %568 = vmatpush1.bf16.msra.mxu0 0
  %569 = vmatprep.subr.bf16.mxu0 0
  %570 = vmatpush1.bf16.msra.mxu0 0
  %571 = vmatprep.subr.bf16.mxu0 0
  %572 = vmatpush1.bf16.msra.mxu0 0
  %573 = vmatprep.subr.bf16.mxu0 0
  %574 = vmatpush1.bf16.msra.mxu0 0
  %575 = vmatprep.subr.bf16.mxu0 0
  %576 = vmatpush1.bf16.msra.mxu0 0
  %577 = vmatprep.subr.bf16.mxu0 0
  %578 = vmatpush1.bf16.msra.mxu0 0
  %579 = vmatprep.subr.bf16.mxu0 0
  %580 = vmatpush1.bf16.msra.mxu0 0
  %581 = vmatprep.subr.bf16.mxu0 0
  %582 = vmatpush1.bf16.msra.mxu0 0
  %583 = vmatprep.subr.bf16.mxu0 0
  %584 = vmatpush1.bf16.msra.mxu0 0
  %585 = vmatprep.subr.bf16.mxu0 0
  %586 = vmatpush1.bf16.msra.mxu0 0
  %587 = vmatprep.subr.bf16.mxu0 0
  %588 = vmatpush1.bf16.msra.mxu0 0
  %589 = vmatprep.subr.bf16.mxu0 0
  %590 = vmatpush1.bf16.msra.mxu0 0
  %591 = vmatprep.subr.bf16.mxu0 0
  %592 = vmatpush1.bf16.msra.mxu0 0
  %593 = vmatprep.subr.bf16.mxu0 0
  %594 = vmatpush1.bf16.msra.mxu0 0
  %595 = vmatprep.mubr.bf16.mxu0 0
  %596 = vmatmul.mubr.bf16.gmra.mrb[0].mxu0 %v561
  %v597 = vpop.f32.mrb[0].mxu0
  %v598 = vadd.f32 %v490, %v597
  %v599 = vpop.f32.mrb[0].mxu0
  %v600 = vpop.f32.mrb[0].mxu0
  %v601 = vpop.f32.mrb[0].mxu0
  %602 = vdwg.mxu0
  %v603 = vtanh.pop %v598
  %v604 = vadd.f32 %v603, 1.0
  %v605 = vmul.f32 %v604, 0.5
  %v606 = vmul.f32 %v605, %v441
  %608 = vrot.lane.b32.xlu0 %v603, 64
  %v609 = vpop.permute.xlu0 %608
  %v611 = vmul.f32 %v605, %v609
  %613 = vrot.lane.b32.xlu0 %v611, 32
  %v614 = vpop.permute.xlu0 %613
  %v616 = vadd.f32 %v606, %v614
  %v617 = vtanh.pop %v616
  %619 = vrot.lane.b32.xlu0 %v617, 64
  %v620 = vpop.permute.xlu0 %619
  %v622 = vmul.f32 %v605, %v620
  %v623 = vpack.c.bf16 %v622, %v622
  %625 = vrot.lane.b32.xlu0 %v623, 32
  %v626 = vpop.permute.xlu0 %625
  %v628 = vsel %vm207, %v626, 0
  %630 = vmatprep.subr.bf16.mxu0 0
  %631 = vmatpush1.bf16.msra.mxu0 %v33
  %632 = vmatprep.subr.bf16.mxu0 0
  %633 = vmatpush1.bf16.msra.mxu0 %v34
  %634 = vmatprep.subr.bf16.mxu0 0
  %635 = vmatpush1.bf16.msra.mxu0 0
  %636 = vmatprep.subr.bf16.mxu0 0
  %637 = vmatpush1.bf16.msra.mxu0 0
  %638 = vmatprep.subr.bf16.mxu0 0
  %639 = vmatpush1.bf16.msra.mxu0 0
  %640 = vmatprep.subr.bf16.mxu0 0
  %641 = vmatpush1.bf16.msra.mxu0 0
  %642 = vmatprep.subr.bf16.mxu0 0
  %643 = vmatpush1.bf16.msra.mxu0 0
  %644 = vmatprep.subr.bf16.mxu0 0
  %645 = vmatpush1.bf16.msra.mxu0 0
  %646 = vmatprep.subr.bf16.mxu0 0
  %647 = vmatpush1.bf16.msra.mxu0 0
  %648 = vmatprep.subr.bf16.mxu0 0
  %649 = vmatpush1.bf16.msra.mxu0 0
  %650 = vmatprep.subr.bf16.mxu0 0
  %651 = vmatpush1.bf16.msra.mxu0 0
  %652 = vmatprep.subr.bf16.mxu0 0
  %653 = vmatpush1.bf16.msra.mxu0 0
  %654 = vmatprep.subr.bf16.mxu0 0
  %655 = vmatpush1.bf16.msra.mxu0 0
  %656 = vmatprep.subr.bf16.mxu0 0
  %657 = vmatpush1.bf16.msra.mxu0 0
  %658 = vmatprep.subr.bf16.mxu0 0
  %659 = vmatpush1.bf16.msra.mxu0 0
  %660 = vmatprep.subr.bf16.mxu0 0
  %661 = vmatpush1.bf16.msra.mxu0 0
  %662 = vmatprep.mubr.bf16.mxu0 0
  %663 = vmatmul.mubr.bf16.gmra.mrb[0].mxu0 %v628
  %v664 = vpop.f32.mrb[0].mxu0
  %v665 = vadd.f32 %v203, %v664
  %v666 = vpop.f32.mrb[0].mxu0
  %v667 = vpop.f32.mrb[0].mxu0
  %v668 = vpop.f32.mrb[0].mxu0
  %669 = vdwg.mxu0
  %670 = vmatprep.subr.bf16.mxu0 0
  %671 = vmatpush1.bf16.msra.mxu0 %v21
  %672 = vmatprep.subr.bf16.mxu0 0
  %673 = vmatpush1.bf16.msra.mxu0 %v22
  %674 = vmatprep.subr.bf16.mxu0 0
  %675 = vmatpush1.bf16.msra.mxu0 0
  %676 = vmatprep.subr.bf16.mxu0 0
  %677 = vmatpush1.bf16.msra.mxu0 0
  %678 = vmatprep.subr.bf16.mxu0 0
  %679 = vmatpush1.bf16.msra.mxu0 0
  %680 = vmatprep.subr.bf16.mxu0 0
  %681 = vmatpush1.bf16.msra.mxu0 0
  %682 = vmatprep.subr.bf16.mxu0 0
  %683 = vmatpush1.bf16.msra.mxu0 0
  %684 = vmatprep.subr.bf16.mxu0 0
  %685 = vmatpush1.bf16.msra.mxu0 0
  %686 = vmatprep.subr.bf16.mxu0 0
  %687 = vmatpush1.bf16.msra.mxu0 0
  %688 = vmatprep.subr.bf16.mxu0 0
  %689 = vmatpush1.bf16.msra.mxu0 0
  %690 = vmatprep.subr.bf16.mxu0 0
  %691 = vmatpush1.bf16.msra.mxu0 0
  %692 = vmatprep.subr.bf16.mxu0 0
  %693 = vmatpush1.bf16.msra.mxu0 0
  %694 = vmatprep.subr.bf16.mxu0 0
  %695 = vmatpush1.bf16.msra.mxu0 0
  %696 = vmatprep.subr.bf16.mxu0 0
  %697 = vmatpush1.bf16.msra.mxu0 0
  %698 = vmatprep.subr.bf16.mxu0 0
  %699 = vmatpush1.bf16.msra.mxu0 0
  %700 = vmatprep.subr.bf16.mxu0 0
  %701 = vmatpush1.bf16.msra.mxu0 0
  %702 = vmatprep.mubr.bf16.mxu0 0
  %703 = vmatmul.mubr.bf16.gmra.mrb[0].mxu0 %v561
  %v704 = vpop.f32.mrb[0].mxu0
  %v705 = vadd.f32 0.0, %v704
  %v706 = vpop.f32.mrb[0].mxu0
  %v707 = vpop.f32.mrb[0].mxu0
  %v708 = vpop.f32.mrb[0].mxu0
  %709 = vdwg.mxu0
  %v710 = vadd.f32 %v162, %v705
  %v711 = vtanh.pop %v710
  %v712 = vadd.f32 %v711, 1.0
  %v713 = vmul.f32 %v712, 0.5
  %v714 = vmul.f32 %v713, %v549
  %716 = vrot.lane.b32.xlu0 %v711, 64
  %v717 = vpop.permute.xlu0 %716
  %v719 = vmul.f32 %v713, %v717
  %721 = vrot.lane.b32.xlu0 %v719, 32
  %v722 = vpop.permute.xlu0 %721
  %v724 = vadd.f32 %v714, %v722
  %v725 = vtanh.pop %v724
  %727 = vrot.lane.b32.xlu0 %v725, 64
  %v728 = vpop.permute.xlu0 %727
  %v730 = vmul.f32 %v713, %v728
  %v731 = vpack.c.bf16 %v730, %v730
  %733 = vrot.lane.b32.xlu0 %v731, 32
  %v734 = vpop.permute.xlu0 %733
  %v736 = vsel %vm207, %v734, 0
  %738 = vmatprep.subr.bf16.mxu0 0
  %739 = vmatpush1.bf16.msra.mxu0 %v27
  %740 = vmatprep.subr.bf16.mxu0 0
  %741 = vmatpush1.bf16.msra.mxu0 %v28
  %742 = vmatprep.subr.bf16.mxu0 0
  %743 = vmatpush1.bf16.msra.mxu0 0
  %744 = vmatprep.subr.bf16.mxu0 0
  %745 = vmatpush1.bf16.msra.mxu0 0
  %746 = vmatprep.subr.bf16.mxu0 0
  %747 = vmatpush1.bf16.msra.mxu0 0
  %748 = vmatprep.subr.bf16.mxu0 0
  %749 = vmatpush1.bf16.msra.mxu0 0
  %750 = vmatprep.subr.bf16.mxu0 0
  %751 = vmatpush1.bf16.msra.mxu0 0
  %752 = vmatprep.subr.bf16.mxu0 0
  %753 = vmatpush1.bf16.msra.mxu0 0
  %754 = vmatprep.subr.bf16.mxu0 0
  %755 = vmatpush1.bf16.msra.mxu0 0
  %756 = vmatprep.subr.bf16.mxu0 0
  %757 = vmatpush1.bf16.msra.mxu0 0
  %758 = vmatprep.subr.bf16.mxu0 0
  %759 = vmatpush1.bf16.msra.mxu0 0
  %760 = vmatprep.subr.bf16.mxu0 0
  %761 = vmatpush1.bf16.msra.mxu0 0
  %762 = vmatprep.subr.bf16.mxu0 0
  %763 = vmatpush1.bf16.msra.mxu0 0
  %764 = vmatprep.subr.bf16.mxu0 0
  %765 = vmatpush1.bf16.msra.mxu0 0
  %766 = vmatprep.subr.bf16.mxu0 0
  %767 = vmatpush1.bf16.msra.mxu0 0
  %768 = vmatprep.subr.bf16.mxu0 0
  %769 = vmatpush1.bf16.msra.mxu0 0
  %770 = vmatprep.mubr.bf16.mxu0 0
  %771 = vmatmul.mubr.bf16.gmra.mrb[0].mxu0 %v736
  %v772 = vpop.f32.mrb[0].mxu0
  %v773 = vadd.f32 %v665, %v772
  %v774 = vpop.f32.mrb[0].mxu0
  %v775 = vpop.f32.mrb[0].mxu0
  %v776 = vpop.f32.mrb[0].mxu0
  %777 = vdwg.mxu0
  %v778 = vtanh.pop %v773
  %v779 = vadd.f32 %v778, 1.0
  %v780 = vmul.f32 %v779, 0.5
  %v781 = vmul.f32 %v780, %v616
  %783 = vrot.lane.b32.xlu0 %v778, 64
  %v784 = vpop.permute.xlu0 %783
  %v786 = vmul.f32 %v780, %v784
  %788 = vrot.lane.b32.xlu0 %v786, 32
  %v789 = vpop.permute.xlu0 %788
  %v791 = vadd.f32 %v781, %v789
  %v792 = vtanh.pop %v791
  %794 = vrot.lane.b32.xlu0 %v792, 64
  %v795 = vpop.permute.xlu0 %794
  %v797 = vmul.f32 %v780, %v795
  %v798 = vpack.c.bf16 %v797, %v797
  %800 = vrot.lane.b32.xlu0 %v798, 32
  %v801 = vpop.permute.xlu0 %800
  %v803 = vsel %vm207, %v801, 0
  %805 = vmatprep.subr.bf16.mxu0 0
  %806 = vmatpush1.bf16.msra.mxu0 %v33
  %807 = vmatprep.subr.bf16.mxu0 0
  %808 = vmatpush1.bf16.msra.mxu0 %v34
  %809 = vmatprep.subr.bf16.mxu0 0
  %810 = vmatpush1.bf16.msra.mxu0 0
  %811 = vmatprep.subr.bf16.mxu0 0
  %812 = vmatpush1.bf16.msra.mxu0 0
  %813 = vmatprep.subr.bf16.mxu0 0
  %814 = vmatpush1.bf16.msra.mxu0 0
  %815 = vmatprep.subr.bf16.mxu0 0
  %816 = vmatpush1.bf16.msra.mxu0 0
  %817 = vmatprep.subr.bf16.mxu0 0
  %818 = vmatpush1.bf16.msra.mxu0 0
  %819 = vmatprep.subr.bf16.mxu0 0
  %820 = vmatpush1.bf16.msra.mxu0 0
  %821 = vmatprep.subr.bf16.mxu0 0
  %822 = vmatpush1.bf16.msra.mxu0 0
  %823 = vmatprep.subr.bf16.mxu0 0
  %824 = vmatpush1.bf16.msra.mxu0 0
  %825 = vmatprep.subr.bf16.mxu0 0
  %826 = vmatpush1.bf16.msra.mxu0 0
  %827 = vmatprep.subr.bf16.mxu0 0
  %828 = vmatpush1.bf16.msra.mxu0 0
  %829 = vmatprep.subr.bf16.mxu0 0
  %830 = vmatpush1.bf16.msra.mxu0 0
  %831 = vmatprep.subr.bf16.mxu0 0
  %832 = vmatpush1.bf16.msra.mxu0 0
  %833 = vmatprep.subr.bf16.mxu0 0
  %834 = vmatpush1.bf16.msra.mxu0 0
  %835 = vmatprep.subr.bf16.mxu0 0
  %836 = vmatpush1.bf16.msra.mxu0 0
  %837 = vmatprep.mubr.bf16.mxu0 0
  %838 = vmatmul.mubr.bf16.gmra.mrb[0].mxu0 %v803
  %v839 = vpop.f32.mrb[0].mxu0
  %v840 = vadd.f32 %v203, %v839
  %v841 = vpop.f32.mrb[0].mxu0
  %v842 = vpop.f32.mrb[0].mxu0
  %v843 = vpop.f32.mrb[0].mxu0
  %844 = vdwg.mxu0
  %845 = vmatprep.subr.bf16.mxu0 0
  %846 = vmatpush1.bf16.msra.mxu0 %v21
  %847 = vmatprep.subr.bf16.mxu0 0
  %848 = vmatpush1.bf16.msra.mxu0 %v22
  %849 = vmatprep.subr.bf16.mxu0 0
  %850 = vmatpush1.bf16.msra.mxu0 0
  %851 = vmatprep.subr.bf16.mxu0 0
  %852 = vmatpush1.bf16.msra.mxu0 0
  %853 = vmatprep.subr.bf16.mxu0 0
  %854 = vmatpush1.bf16.msra.mxu0 0
  %855 = vmatprep.subr.bf16.mxu0 0
  %856 = vmatpush1.bf16.msra.mxu0 0
  %857 = vmatprep.subr.bf16.mxu0 0
  %858 = vmatpush1.bf16.msra.mxu0 0
  %859 = vmatprep.subr.bf16.mxu0 0
  %860 = vmatpush1.bf16.msra.mxu0 0
  %861 = vmatprep.subr.bf16.mxu0 0
  %862 = vmatpush1.bf16.msra.mxu0 0
  %863 = vmatprep.subr.bf16.mxu0 0
  %864 = vmatpush1.bf16.msra.mxu0 0
  %865 = vmatprep.subr.bf16.mxu0 0
  %866 = vmatpush1.bf16.msra.mxu0 0
  %867 = vmatprep.subr.bf16.mxu0 0
  %868 = vmatpush1.bf16.msra.mxu0 0
  %869 = vmatprep.subr.bf16.mxu0 0
  %870 = vmatpush1.bf16.msra.mxu0 0
  %871 = vmatprep.subr.bf16.mxu0 0
  %872 = vmatpush1.bf16.msra.mxu0 0
  %873 = vmatprep.subr.bf16.mxu0 0
  %874 = vmatpush1.bf16.msra.mxu0 0
  %875 = vmatprep.subr.bf16.mxu0 0
  %876 = vmatpush1.bf16.msra.mxu0 0
  %877 = vmatprep.mubr.bf16.mxu0 0
  %878 = vmatmul.mubr.bf16.gmra.mrb[0].mxu0 %v736
  %v879 = vpop.f32.mrb[0].mxu0
  %v880 = vadd.f32 0.0, %v879
  %v881 = vpop.f32.mrb[0].mxu0
  %v882 = vpop.f32.mrb[0].mxu0
  %v883 = vpop.f32.mrb[0].mxu0
  %884 = vdwg.mxu0
  %v885 = vadd.f32 %v167, %v880
  %v886 = vtanh.pop %v885
  %v887 = vadd.f32 %v886, 1.0
  %v888 = vmul.f32 %v887, 0.5
  %v889 = vmul.f32 %v888, %v724
  %891 = vrot.lane.b32.xlu0 %v886, 64
  %v892 = vpop.permute.xlu0 %891
  %v894 = vmul.f32 %v888, %v892
  %896 = vrot.lane.b32.xlu0 %v894, 32
  %v897 = vpop.permute.xlu0 %896
  %v899 = vadd.f32 %v889, %v897
  %v900 = vtanh.pop %v899
  %902 = vrot.lane.b32.xlu0 %v900, 64
  %v903 = vpop.permute.xlu0 %902
  %v905 = vmul.f32 %v888, %v903
  %v906 = vpack.c.bf16 %v905, %v905
  %908 = vrot.lane.b32.xlu0 %v906, 32
  %v909 = vpop.permute.xlu0 %908
  %v911 = vsel %vm207, %v909, 0
  %913 = vmatprep.subr.bf16.mxu0 0
  %914 = vmatpush1.bf16.msra.mxu0 %v27
  %915 = vmatprep.subr.bf16.mxu0 0
  %916 = vmatpush1.bf16.msra.mxu0 %v28
  %917 = vmatprep.subr.bf16.mxu0 0
  %918 = vmatpush1.bf16.msra.mxu0 0
  %919 = vmatprep.subr.bf16.mxu0 0
  %920 = vmatpush1.bf16.msra.mxu0 0
  %921 = vmatprep.subr.bf16.mxu0 0
  %922 = vmatpush1.bf16.msra.mxu0 0
  %923 = vmatprep.subr.bf16.mxu0 0
  %924 = vmatpush1.bf16.msra.mxu0 0
  %925 = vmatprep.subr.bf16.mxu0 0
  %926 = vmatpush1.bf16.msra.mxu0 0
  %927 = vmatprep.subr.bf16.mxu0 0
  %928 = vmatpush1.bf16.msra.mxu0 0
  %929 = vmatprep.subr.bf16.mxu0 0
  %930 = vmatpush1.bf16.msra.mxu0 0
  %931 = vmatprep.subr.bf16.mxu0 0
  %932 = vmatpush1.bf16.msra.mxu0 0
  %933 = vmatprep.subr.bf16.mxu0 0
  %934 = vmatpush1.bf16.msra.mxu0 0
  %935 = vmatprep.subr.bf16.mxu0 0
  %936 = vmatpush1.bf16.msra.mxu0 0
  %937 = vmatprep.subr.bf16.mxu0 0
  %938 = vmatpush1.bf16.msra.mxu0 0
  %939 = vmatprep.subr.bf16.mxu0 0
  %940 = vmatpush1.bf16.msra.mxu0 0
  %941 = vmatprep.subr.bf16.mxu0 0
  %942 = vmatpush1.bf16.msra.mxu0 0
  %943 = vmatprep.subr.bf16.mxu0 0
  %944 = vmatpush1.bf16.msra.mxu0 0
  %945 = vmatprep.mubr.bf16.mxu0 0
  %946 = vmatmul.mubr.bf16.gmra.mrb[0].mxu0 %v911
  %v947 = vpop.f32.mrb[0].mxu0
  %v948 = vadd.f32 %v840, %v947
  %v949 = vpop.f32.mrb[0].mxu0
  %v950 = vpop.f32.mrb[0].mxu0
  %v951 = vpop.f32.mrb[0].mxu0
  %952 = vdwg.mxu0
  %v953 = vtanh.pop %v948
  %v954 = vadd.f32 %v953, 1.0
  %v955 = vmul.f32 %v954, 0.5
  %v956 = vmul.f32 %v955, %v791
  %958 = vrot.lane.b32.xlu0 %v953, 64
  %v959 = vpop.permute.xlu0 %958
  %v961 = vmul.f32 %v955, %v959
  %963 = vrot.lane.b32.xlu0 %v961, 32
  %v964 = vpop.permute.xlu0 %963
  %v966 = vadd.f32 %v956, %v964
  %v967 = vtanh.pop %v966
  %969 = vrot.lane.b32.xlu0 %v967, 64
  %v970 = vpop.permute.xlu0 %969
  %v972 = vmul.f32 %v955, %v970
  %v973 = vpack.c.bf16 %v972, %v972
  %975 = vrot.lane.b32.xlu0 %v973, 32
  %v976 = vpop.permute.xlu0 %975
  %v978 = vsel %vm207, %v976, 0
  %980 = vmatprep.subr.bf16.mxu0 0
  %981 = vmatpush1.bf16.msra.mxu0 %v33
  %982 = vmatprep.subr.bf16.mxu0 0
  %983 = vmatpush1.bf16.msra.mxu0 %v34
  %984 = vmatprep.subr.bf16.mxu0 0
  %985 = vmatpush1.bf16.msra.mxu0 0
  %986 = vmatprep.subr.bf16.mxu0 0
  %987 = vmatpush1.bf16.msra.mxu0 0
  %988 = vmatprep.subr.bf16.mxu0 0
  %989 = vmatpush1.bf16.msra.mxu0 0
  %990 = vmatprep.subr.bf16.mxu0 0
  %991 = vmatpush1.bf16.msra.mxu0 0
  %992 = vmatprep.subr.bf16.mxu0 0
  %993 = vmatpush1.bf16.msra.mxu0 0
  %994 = vmatprep.subr.bf16.mxu0 0
  %995 = vmatpush1.bf16.msra.mxu0 0
  %996 = vmatprep.subr.bf16.mxu0 0
  %997 = vmatpush1.bf16.msra.mxu0 0
  %998 = vmatprep.subr.bf16.mxu0 0
  %999 = vmatpush1.bf16.msra.mxu0 0
  %1000 = vmatprep.subr.bf16.mxu0 0
  %1001 = vmatpush1.bf16.msra.mxu0 0
  %1002 = vmatprep.subr.bf16.mxu0 0
  %1003 = vmatpush1.bf16.msra.mxu0 0
  %1004 = vmatprep.subr.bf16.mxu0 0
  %1005 = vmatpush1.bf16.msra.mxu0 0
  %1006 = vmatprep.subr.bf16.mxu0 0
  %1007 = vmatpush1.bf16.msra.mxu0 0
  %1008 = vmatprep.subr.bf16.mxu0 0
  %1009 = vmatpush1.bf16.msra.mxu0 0
  %1010 = vmatprep.subr.bf16.mxu0 0
  %1011 = vmatpush1.bf16.msra.mxu0 0
  %1012 = vmatprep.mubr.bf16.mxu0 0
  %1013 = vmatmul.mubr.bf16.gmra.mrb[0].mxu0 %v978
  %v1014 = vpop.f32.mrb[0].mxu0
  %v1015 = vadd.f32 %v203, %v1014
  %v1016 = vpop.f32.mrb[0].mxu0
  %v1017 = vpop.f32.mrb[0].mxu0
  %v1018 = vpop.f32.mrb[0].mxu0
  %1019 = vdwg.mxu0
  %1020 = vmatprep.subr.bf16.mxu0 0
  %1021 = vmatpush1.bf16.msra.mxu0 %v21
  %1022 = vmatprep.subr.bf16.mxu0 0
  %1023 = vmatpush1.bf16.msra.mxu0 %v22
  %1024 = vmatprep.subr.bf16.mxu0 0
  %1025 = vmatpush1.bf16.msra.mxu0 0
  %1026 = vmatprep.subr.bf16.mxu0 0
  %1027 = vmatpush1.bf16.msra.mxu0 0
  %1028 = vmatprep.subr.bf16.mxu0 0
  %1029 = vmatpush1.bf16.msra.mxu0 0
  %1030 = vmatprep.subr.bf16.mxu0 0
  %1031 = vmatpush1.bf16.msra.mxu0 0
  %1032 = vmatprep.subr.bf16.mxu0 0
  %1033 = vmatpush1.bf16.msra.mxu0 0
  %1034 = vmatprep.subr.bf16.mxu0 0
  %1035 = vmatpush1.bf16.msra.mxu0 0
  %1036 = vmatprep.subr.bf16.mxu0 0
  %1037 = vmatpush1.bf16.msra.mxu0 0
  %1038 = vmatprep.subr.bf16.mxu0 0
  %1039 = vmatpush1.bf16.msra.mxu0 0
  %1040 = vmatprep.subr.bf16.mxu0 0
  %1041 = vmatpush1.bf16.msra.mxu0 0
  %1042 = vmatprep.subr.bf16.mxu0 0
  %1043 = vmatpush1.bf16.msra.mxu0 0
  %1044 = vmatprep.subr.bf16.mxu0 0
  %1045 = vmatpush1.bf16.msra.mxu0 0
  %1046 = vmatprep.subr.bf16.mxu0 0
  %1047 = vmatpush1.bf16.msra.mxu0 0
  %1048 = vmatprep.subr.bf16.mxu0 0
  %1049 = vmatpush1.bf16.msra.mxu0 0
  %1050 = vmatprep.subr.bf16.mxu0 0
  %1051 = vmatpush1.bf16.msra.mxu0 0
  %1052 = vmatprep.mubr.bf16.mxu0 0
  %1053 = vmatmul.mubr.bf16.gmra.mrb[0].mxu0 %v911
  %v1054 = vpop.f32.mrb[0].mxu0
  %v1055 = vadd.f32 0.0, %v1054
  %v1056 = vpop.f32.mrb[0].mxu0
  %v1057 = vpop.f32.mrb[0].mxu0
  %v1058 = vpop.f32.mrb[0].mxu0
  %1059 = vdwg.mxu0
  %v1060 = vadd.f32 %v172, %v1055
  %v1061 = vtanh.pop %v1060
  %v1062 = vadd.f32 %v1061, 1.0
  %v1063 = vmul.f32 %v1062, 0.5
  %v1064 = vmul.f32 %v1063, %v899
  %1066 = vrot.lane.b32.xlu0 %v1061, 64
  %v1067 = vpop.permute.xlu0 %1066
  %v1069 = vmul.f32 %v1063, %v1067
  %1071 = vrot.lane.b32.xlu0 %v1069, 32
  %v1072 = vpop.permute.xlu0 %1071
  %v1074 = vadd.f32 %v1064, %v1072
  %v1075 = vtanh.pop %v1074
  %1077 = vrot.lane.b32.xlu0 %v1075, 64
  %v1078 = vpop.permute.xlu0 %1077
  %v1080 = vmul.f32 %v1063, %v1078
  %v1081 = vpack.c.bf16 %v1080, %v1080
  %1083 = vrot.lane.b32.xlu0 %v1081, 32
  %v1084 = vpop.permute.xlu0 %1083
  %v1086 = vsel %vm207, %v1084, 0
  %1088 = vmatprep.subr.bf16.mxu0 0
  %1089 = vmatpush1.bf16.msra.mxu0 %v27
  %1090 = vmatprep.subr.bf16.mxu0 0
  %1091 = vmatpush1.bf16.msra.mxu0 %v28
  %1092 = vmatprep.subr.bf16.mxu0 0
  %1093 = vmatpush1.bf16.msra.mxu0 0
  %1094 = vmatprep.subr.bf16.mxu0 0
  %1095 = vmatpush1.bf16.msra.mxu0 0
  %1096 = vmatprep.subr.bf16.mxu0 0
  %1097 = vmatpush1.bf16.msra.mxu0 0
  %1098 = vmatprep.subr.bf16.mxu0 0
  %1099 = vmatpush1.bf16.msra.mxu0 0
  %1100 = vmatprep.subr.bf16.mxu0 0
  %1101 = vmatpush1.bf16.msra.mxu0 0
  %1102 = vmatprep.subr.bf16.mxu0 0
  %1103 = vmatpush1.bf16.msra.mxu0 0
  %1104 = vmatprep.subr.bf16.mxu0 0
  %1105 = vmatpush1.bf16.msra.mxu0 0
  %1106 = vmatprep.subr.bf16.mxu0 0
  %1107 = vmatpush1.bf16.msra.mxu0 0
  %1108 = vmatprep.subr.bf16.mxu0 0
  %1109 = vmatpush1.bf16.msra.mxu0 0
  %1110 = vmatprep.subr.bf16.mxu0 0
  %1111 = vmatpush1.bf16.msra.mxu0 0
  %1112 = vmatprep.subr.bf16.mxu0 0
  %1113 = vmatpush1.bf16.msra.mxu0 0
  %1114 = vmatprep.subr.bf16.mxu0 0
  %1115 = vmatpush1.bf16.msra.mxu0 0
  %1116 = vmatprep.subr.bf16.mxu0 0
  %1117 = vmatpush1.bf16.msra.mxu0 0
  %1118 = vmatprep.subr.bf16.mxu0 0
  %1119 = vmatpush1.bf16.msra.mxu0 0
  %1120 = vmatprep.mubr.bf16.mxu0 0
  %1121 = vmatmul.mubr.bf16.gmra.mrb[0].mxu0 %v1086
  %v1122 = vpop.f32.mrb[0].mxu0
  %v1123 = vadd.f32 %v1015, %v1122
  %v1124 = vpop.f32.mrb[0].mxu0
  %v1125 = vpop.f32.mrb[0].mxu0
  %v1126 = vpop.f32.mrb[0].mxu0
  %1127 = vdwg.mxu0
  %v1128 = vtanh.pop %v1123
  %v1129 = vadd.f32 %v1128, 1.0
  %v1130 = vmul.f32 %v1129, 0.5
  %v1131 = vmul.f32 %v1130, %v966
  %1133 = vrot.lane.b32.xlu0 %v1128, 64
  %v1134 = vpop.permute.xlu0 %1133
  %v1136 = vmul.f32 %v1130, %v1134
  %1138 = vrot.lane.b32.xlu0 %v1136, 32
  %v1139 = vpop.permute.xlu0 %1138
  %v1141 = vadd.f32 %v1131, %v1139
  %v1142 = vtanh.pop %v1141
  %1144 = vrot.lane.b32.xlu0 %v1142, 64
  %v1145 = vpop.permute.xlu0 %1144
  %v1147 = vmul.f32 %v1130, %v1145
  %v1148 = vpack.c.bf16 %v1147, %v1147
  %1150 = vrot.lane.b32.xlu0 %v1148, 32
  %v1151 = vpop.permute.xlu0 %1150
  %v1153 = vsel %vm207, %v1151, 0
  %1155 = vmatprep.subr.bf16.mxu0 0
  %1156 = vmatpush1.bf16.msra.mxu0 %v33
  %1157 = vmatprep.subr.bf16.mxu0 0
  %1158 = vmatpush1.bf16.msra.mxu0 %v34
  %1159 = vmatprep.subr.bf16.mxu0 0
  %1160 = vmatpush1.bf16.msra.mxu0 0
  %1161 = vmatprep.subr.bf16.mxu0 0
  %1162 = vmatpush1.bf16.msra.mxu0 0
  %1163 = vmatprep.subr.bf16.mxu0 0
  %1164 = vmatpush1.bf16.msra.mxu0 0
  %1165 = vmatprep.subr.bf16.mxu0 0
  %1166 = vmatpush1.bf16.msra.mxu0 0
  %1167 = vmatprep.subr.bf16.mxu0 0
  %1168 = vmatpush1.bf16.msra.mxu0 0
  %1169 = vmatprep.subr.bf16.mxu0 0
  %1170 = vmatpush1.bf16.msra.mxu0 0
  %1171 = vmatprep.subr.bf16.mxu0 0
  %1172 = vmatpush1.bf16.msra.mxu0 0
  %1173 = vmatprep.subr.bf16.mxu0 0
  %1174 = vmatpush1.bf16.msra.mxu0 0
  %1175 = vmatprep.subr.bf16.mxu0 0
  %1176 = vmatpush1.bf16.msra.mxu0 0
  %1177 = vmatprep.subr.bf16.mxu0 0
  %1178 = vmatpush1.bf16.msra.mxu0 0
  %1179 = vmatprep.subr.bf16.mxu0 0
  %1180 = vmatpush1.bf16.msra.mxu0 0
  %1181 = vmatprep.subr.bf16.mxu0 0
  %1182 = vmatpush1.bf16.msra.mxu0 0
  %1183 = vmatprep.subr.bf16.mxu0 0
  %1184 = vmatpush1.bf16.msra.mxu0 0
  %1185 = vmatprep.subr.bf16.mxu0 0
  %1186 = vmatpush1.bf16.msra.mxu0 0
  %1187 = vmatprep.mubr.bf16.mxu0 0
  %1188 = vmatmul.mubr.bf16.gmra.mrb[0].mxu0 %v1153
  %v1189 = vpop.f32.mrb[0].mxu0
  %v1190 = vadd.f32 %v203, %v1189
  %v1191 = vpop.f32.mrb[0].mxu0
  %v1192 = vpop.f32.mrb[0].mxu0
  %v1193 = vpop.f32.mrb[0].mxu0
  %1194 = vdwg.mxu0
  %1195 = vmatprep.subr.bf16.mxu0 0
  %1196 = vmatpush1.bf16.msra.mxu0 %v21
  %1197 = vmatprep.subr.bf16.mxu0 0
  %1198 = vmatpush1.bf16.msra.mxu0 %v22
  %1199 = vmatprep.subr.bf16.mxu0 0
  %1200 = vmatpush1.bf16.msra.mxu0 0
  %1201 = vmatprep.subr.bf16.mxu0 0
  %1202 = vmatpush1.bf16.msra.mxu0 0
  %1203 = vmatprep.subr.bf16.mxu0 0
  %1204 = vmatpush1.bf16.msra.mxu0 0
  %1205 = vmatprep.subr.bf16.mxu0 0
  %1206 = vmatpush1.bf16.msra.mxu0 0
  %1207 = vmatprep.subr.bf16.mxu0 0
  %1208 = vmatpush1.bf16.msra.mxu0 0
  %1209 = vmatprep.subr.bf16.mxu0 0
  %1210 = vmatpush1.bf16.msra.mxu0 0
  %1211 = vmatprep.subr.bf16.mxu0 0
  %1212 = vmatpush1.bf16.msra.mxu0 0
  %1213 = vmatprep.subr.bf16.mxu0 0
  %1214 = vmatpush1.bf16.msra.mxu0 0
  %1215 = vmatprep.subr.bf16.mxu0 0
  %1216 = vmatpush1.bf16.msra.mxu0 0
  %1217 = vmatprep.subr.bf16.mxu0 0
  %1218 = vmatpush1.bf16.msra.mxu0 0
  %1219 = vmatprep.subr.bf16.mxu0 0
  %1220 = vmatpush1.bf16.msra.mxu0 0
  %1221 = vmatprep.subr.bf16.mxu0 0
  %1222 = vmatpush1.bf16.msra.mxu0 0
  %1223 = vmatprep.subr.bf16.mxu0 0
  %1224 = vmatpush1.bf16.msra.mxu0 0
  %1225 = vmatprep.subr.bf16.mxu0 0
  %1226 = vmatpush1.bf16.msra.mxu0 0
  %1227 = vmatprep.mubr.bf16.mxu0 0
  %1228 = vmatmul.mubr.bf16.gmra.mrb[0].mxu0 %v1086
  %v1229 = vpop.f32.mrb[0].mxu0
  %v1230 = vadd.f32 0.0, %v1229
  %v1231 = vpop.f32.mrb[0].mxu0
  %v1232 = vpop.f32.mrb[0].mxu0
  %v1233 = vpop.f32.mrb[0].mxu0
  %1234 = vdwg.mxu0
  %v1235 = vadd.f32 %v177, %v1230
  %v1236 = vtanh.pop %v1235
  %v1237 = vadd.f32 %v1236, 1.0
  %v1238 = vmul.f32 %v1237, 0.5
  %v1239 = vmul.f32 %v1238, %v1074
  %1241 = vrot.lane.b32.xlu0 %v1236, 64
  %v1242 = vpop.permute.xlu0 %1241
  %v1244 = vmul.f32 %v1238, %v1242
  %1246 = vrot.lane.b32.xlu0 %v1244, 32
  %v1247 = vpop.permute.xlu0 %1246
  %v1249 = vadd.f32 %v1239, %v1247
  %v1250 = vtanh.pop %v1249
  %1252 = vrot.lane.b32.xlu0 %v1250, 64
  %v1253 = vpop.permute.xlu0 %1252
  %v1255 = vmul.f32 %v1238, %v1253
  %v1256 = vpack.c.bf16 %v1255, %v1255
  %1258 = vrot.lane.b32.xlu0 %v1256, 32
  %v1259 = vpop.permute.xlu0 %1258
  %v1261 = vsel %vm207, %v1259, 0
  %1263 = vmatprep.subr.bf16.mxu0 0
  %1264 = vmatpush1.bf16.msra.mxu0 %v27
  %1265 = vmatprep.subr.bf16.mxu0 0
  %1266 = vmatpush1.bf16.msra.mxu0 %v28
  %1267 = vmatprep.subr.bf16.mxu0 0
  %1268 = vmatpush1.bf16.msra.mxu0 0
  %1269 = vmatprep.subr.bf16.mxu0 0
  %1270 = vmatpush1.bf16.msra.mxu0 0
  %1271 = vmatprep.subr.bf16.mxu0 0
  %1272 = vmatpush1.bf16.msra.mxu0 0
  %1273 = vmatprep.subr.bf16.mxu0 0
  %1274 = vmatpush1.bf16.msra.mxu0 0
  %1275 = vmatprep.subr.bf16.mxu0 0
  %1276 = vmatpush1.bf16.msra.mxu0 0
  %1277 = vmatprep.subr.bf16.mxu0 0
  %1278 = vmatpush1.bf16.msra.mxu0 0
  %1279 = vmatprep.subr.bf16.mxu0 0
  %1280 = vmatpush1.bf16.msra.mxu0 0
  %1281 = vmatprep.subr.bf16.mxu0 0
  %1282 = vmatpush1.bf16.msra.mxu0 0
  %1283 = vmatprep.subr.bf16.mxu0 0
  %1284 = vmatpush1.bf16.msra.mxu0 0
  %1285 = vmatprep.subr.bf16.mxu0 0
  %1286 = vmatpush1.bf16.msra.mxu0 0
  %1287 = vmatprep.subr.bf16.mxu0 0
  %1288 = vmatpush1.bf16.msra.mxu0 0
  %1289 = vmatprep.subr.bf16.mxu0 0
  %1290 = vmatpush1.bf16.msra.mxu0 0
  %1291 = vmatprep.subr.bf16.mxu0 0
  %1292 = vmatpush1.bf16.msra.mxu0 0
  %1293 = vmatprep.subr.bf16.mxu0 0
  %1294 = vmatpush1.bf16.msra.mxu0 0
  %1295 = vmatprep.mubr.bf16.mxu0 0
  %1296 = vmatmul.mubr.bf16.gmra.mrb[0].mxu0 %v1261
  %v1297 = vpop.f32.mrb[0].mxu0
  %v1298 = vadd.f32 %v1190, %v1297
  %v1299 = vpop.f32.mrb[0].mxu0
  %v1300 = vpop.f32.mrb[0].mxu0
  %v1301 = vpop.f32.mrb[0].mxu0
  %1302 = vdwg.mxu0
  %v1303 = vtanh.pop %v1298
  %v1304 = vadd.f32 %v1303, 1.0
  %v1305 = vmul.f32 %v1304, 0.5
  %v1306 = vmul.f32 %v1305, %v1141
  %1308 = vrot.lane.b32.xlu0 %v1303, 64
  %v1309 = vpop.permute.xlu0 %1308
  %v1311 = vmul.f32 %v1305, %v1309
  %1313 = vrot.lane.b32.xlu0 %v1311, 32
  %v1314 = vpop.permute.xlu0 %1313
  %v1316 = vadd.f32 %v1306, %v1314
  %v1317 = vtanh.pop %v1316
  %1319 = vrot.lane.b32.xlu0 %v1317, 64
  %v1320 = vpop.permute.xlu0 %1319
  %v1322 = vmul.f32 %v1305, %v1320
  %v1323 = vpack.c.bf16 %v1322, %v1322
  %1325 = vrot.lane.b32.xlu0 %v1323, 32
  %v1326 = vpop.permute.xlu0 %1325
  %v1328 = vsel %vm207, %v1326, 0
  %1330 = vmatprep.subr.bf16.mxu0 0
  %1331 = vmatpush1.bf16.msra.mxu0 %v33
  %1332 = vmatprep.subr.bf16.mxu0 0
  %1333 = vmatpush1.bf16.msra.mxu0 %v34
  %1334 = vmatprep.subr.bf16.mxu0 0
  %1335 = vmatpush1.bf16.msra.mxu0 0
  %1336 = vmatprep.subr.bf16.mxu0 0
  %1337 = vmatpush1.bf16.msra.mxu0 0
  %1338 = vmatprep.subr.bf16.mxu0 0
  %1339 = vmatpush1.bf16.msra.mxu0 0
  %1340 = vmatprep.subr.bf16.mxu0 0
  %1341 = vmatpush1.bf16.msra.mxu0 0
  %1342 = vmatprep.subr.bf16.mxu0 0
  %1343 = vmatpush1.bf16.msra.mxu0 0
  %1344 = vmatprep.subr.bf16.mxu0 0
  %1345 = vmatpush1.bf16.msra.mxu0 0
  %1346 = vmatprep.subr.bf16.mxu0 0
  %1347 = vmatpush1.bf16.msra.mxu0 0
  %1348 = vmatprep.subr.bf16.mxu0 0
  %1349 = vmatpush1.bf16.msra.mxu0 0
  %1350 = vmatprep.subr.bf16.mxu0 0
  %1351 = vmatpush1.bf16.msra.mxu0 0
  %1352 = vmatprep.subr.bf16.mxu0 0
  %1353 = vmatpush1.bf16.msra.mxu0 0
  %1354 = vmatprep.subr.bf16.mxu0 0
  %1355 = vmatpush1.bf16.msra.mxu0 0
  %1356 = vmatprep.subr.bf16.mxu0 0
  %1357 = vmatpush1.bf16.msra.mxu0 0
  %1358 = vmatprep.subr.bf16.mxu0 0
  %1359 = vmatpush1.bf16.msra.mxu0 0
  %1360 = vmatprep.subr.bf16.mxu0 0
  %1361 = vmatpush1.bf16.msra.mxu0 0
  %1362 = vmatprep.mubr.bf16.mxu0 0
  %1363 = vmatmul.mubr.bf16.gmra.mrb[0].mxu0 %v1328
  %v1364 = vpop.f32.mrb[0].mxu0
  %v1365 = vadd.f32 %v203, %v1364
  %v1366 = vpop.f32.mrb[0].mxu0
  %v1367 = vpop.f32.mrb[0].mxu0
  %v1368 = vpop.f32.mrb[0].mxu0
  %1369 = vdwg.mxu0
  %1370 = vmatprep.subr.bf16.mxu0 0
  %1371 = vmatpush1.bf16.msra.mxu0 %v21
  %1372 = vmatprep.subr.bf16.mxu0 0
  %1373 = vmatpush1.bf16.msra.mxu0 %v22
  %1374 = vmatprep.subr.bf16.mxu0 0
  %1375 = vmatpush1.bf16.msra.mxu0 0
  %1376 = vmatprep.subr.bf16.mxu0 0
  %1377 = vmatpush1.bf16.msra.mxu0 0
  %1378 = vmatprep.subr.bf16.mxu0 0
  %1379 = vmatpush1.bf16.msra.mxu0 0
  %1380 = vmatprep.subr.bf16.mxu0 0
  %1381 = vmatpush1.bf16.msra.mxu0 0
  %1382 = vmatprep.subr.bf16.mxu0 0
  %1383 = vmatpush1.bf16.msra.mxu0 0
  %1384 = vmatprep.subr.bf16.mxu0 0
  %1385 = vmatpush1.bf16.msra.mxu0 0
  %1386 = vmatprep.subr.bf16.mxu0 0
  %1387 = vmatpush1.bf16.msra.mxu0 0
  %1388 = vmatprep.subr.bf16.mxu0 0
  %1389 = vmatpush1.bf16.msra.mxu0 0
  %1390 = vmatprep.subr.bf16.mxu0 0
  %1391 = vmatpush1.bf16.msra.mxu0 0
  %1392 = vmatprep.subr.bf16.mxu0 0
  %1393 = vmatpush1.bf16.msra.mxu0 0
  %1394 = vmatprep.subr.bf16.mxu0 0
  %1395 = vmatpush1.bf16.msra.mxu0 0
  %1396 = vmatprep.subr.bf16.mxu0 0
  %1397 = vmatpush1.bf16.msra.mxu0 0
  %1398 = vmatprep.subr.bf16.mxu0 0
  %1399 = vmatpush1.bf16.msra.mxu0 0
  %1400 = vmatprep.subr.bf16.mxu0 0
  %1401 = vmatpush1.bf16.msra.mxu0 0
  %1402 = vmatprep.mubr.bf16.mxu0 0
  %1403 = vmatmul.mubr.bf16.gmra.mrb[0].mxu0 %v1261
  %v1404 = vpop.f32.mrb[0].mxu0
  %v1405 = vadd.f32 0.0, %v1404
  %v1406 = vpop.f32.mrb[0].mxu0
  %v1407 = vpop.f32.mrb[0].mxu0
  %v1408 = vpop.f32.mrb[0].mxu0
  %1409 = vdwg.mxu0
  %v1410 = vadd.f32 %v182, %v1405
  %v1411 = vtanh.pop %v1410
  %v1412 = vadd.f32 %v1411, 1.0
  %v1413 = vmul.f32 %v1412, 0.5
  %v1414 = vmul.f32 %v1413, %v1249
  %1416 = vrot.lane.b32.xlu0 %v1411, 64
  %v1417 = vpop.permute.xlu0 %1416
  %v1419 = vmul.f32 %v1413, %v1417
  %1421 = vrot.lane.b32.xlu0 %v1419, 32
  %v1422 = vpop.permute.xlu0 %1421
  %v1424 = vadd.f32 %v1414, %v1422
  %v1425 = vtanh.pop %v1424
  %1427 = vrot.lane.b32.xlu0 %v1425, 64
  %v1428 = vpop.permute.xlu0 %1427
  %v1430 = vmul.f32 %v1413, %v1428
  %v1431 = vpack.c.bf16 %v1430, %v1430
  %1433 = vrot.lane.b32.xlu0 %v1431, 32
  %v1434 = vpop.permute.xlu0 %1433
  %v1436 = vsel %vm207, %v1434, 0
  %1438 = vmatprep.subr.bf16.mxu0 0
  %1439 = vmatpush1.bf16.msra.mxu0 %v27
  %1440 = vmatprep.subr.bf16.mxu0 0
  %1441 = vmatpush1.bf16.msra.mxu0 %v28
  %1442 = vmatprep.subr.bf16.mxu0 0
  %1443 = vmatpush1.bf16.msra.mxu0 0
  %1444 = vmatprep.subr.bf16.mxu0 0
  %1445 = vmatpush1.bf16.msra.mxu0 0
  %1446 = vmatprep.subr.bf16.mxu0 0
  %1447 = vmatpush1.bf16.msra.mxu0 0
  %1448 = vmatprep.subr.bf16.mxu0 0
  %1449 = vmatpush1.bf16.msra.mxu0 0
  %1450 = vmatprep.subr.bf16.mxu0 0
  %1451 = vmatpush1.bf16.msra.mxu0 0
  %1452 = vmatprep.subr.bf16.mxu0 0
  %1453 = vmatpush1.bf16.msra.mxu0 0
  %1454 = vmatprep.subr.bf16.mxu0 0
  %1455 = vmatpush1.bf16.msra.mxu0 0
  %1456 = vmatprep.subr.bf16.mxu0 0
  %1457 = vmatpush1.bf16.msra.mxu0 0
  %1458 = vmatprep.subr.bf16.mxu0 0
  %1459 = vmatpush1.bf16.msra.mxu0 0
  %1460 = vmatprep.subr.bf16.mxu0 0
  %1461 = vmatpush1.bf16.msra.mxu0 0
  %1462 = vmatprep.subr.bf16.mxu0 0
  %1463 = vmatpush1.bf16.msra.mxu0 0
  %1464 = vmatprep.subr.bf16.mxu0 0
  %1465 = vmatpush1.bf16.msra.mxu0 0
  %1466 = vmatprep.subr.bf16.mxu0 0
  %1467 = vmatpush1.bf16.msra.mxu0 0
  %1468 = vmatprep.subr.bf16.mxu0 0
  %1469 = vmatpush1.bf16.msra.mxu0 0
  %1470 = vmatprep.mubr.bf16.mxu0 0
  %1471 = vmatmul.mubr.bf16.gmra.mrb[0].mxu0 %v1436
  %v1472 = vpop.f32.mrb[0].mxu0
  %v1473 = vadd.f32 %v1365, %v1472
  %v1474 = vpop.f32.mrb[0].mxu0
  %v1475 = vpop.f32.mrb[0].mxu0
  %v1476 = vpop.f32.mrb[0].mxu0
  %1477 = vdwg.mxu0
  %v1478 = vtanh.pop %v1473
  %v1479 = vadd.f32 %v1478, 1.0
  %v1480 = vmul.f32 %v1479, 0.5
  %v1481 = vmul.f32 %v1480, %v1316
  %1483 = vrot.lane.b32.xlu0 %v1478, 64
  %v1484 = vpop.permute.xlu0 %1483
  %v1486 = vmul.f32 %v1480, %v1484
  %1488 = vrot.lane.b32.xlu0 %v1486, 32
  %v1489 = vpop.permute.xlu0 %1488
  %v1491 = vadd.f32 %v1481, %v1489
  %v1492 = vtanh.pop %v1491
  %1494 = vrot.lane.b32.xlu0 %v1492, 64
  %v1495 = vpop.permute.xlu0 %1494
  %v1497 = vmul.f32 %v1480, %v1495
  %v1498 = vlaneseq
  %v1499 = vshrl.u32 %v1498, 7
  %v1500 = vsub.s32 0, %v1499
  %v1501 = vrot.slane %v41, %v1500
  %1503 = vrot.lane.b32.xlu0 %v1497, 32
  %v1504 = vpop.permute.xlu0 %1503
  %v1505 = vsel %vm207, %v1504, 0
  %1507 = vmatprep.subr.mxu0 0.0
  %1508 = vmatpush1.msra.mxu0 %v35
  %1509 = vmatprep.subr.mxu0 0.0
  %1510 = vmatpush1.msra.mxu0 %v36
  %1511 = vmatprep.subr.mxu0 0.0
  %1512 = vmatpush1.msra.mxu0 %v37
  %1513 = vmatprep.subr.mxu0 0.0
  %1514 = vmatpush1.msra.mxu0 %v38
  %1515 = vmatprep.subr.mxu0 0.0
  %1516 = vmatpush1.msra.mxu0 0.0
  %1517 = vmatprep.subr.mxu0 0.0
  %1518 = vmatpush1.msra.mxu0 0.0
  %1519 = vmatprep.subr.mxu0 0.0
  %1520 = vmatpush1.msra.mxu0 0.0
  %1521 = vmatprep.subr.mxu0 0.0
  %1522 = vmatpush1.msra.mxu0 0.0
  %1523 = vmatprep.subr.mxu0 0.0
  %1524 = vmatpush1.msra.mxu0 0.0
  %1525 = vmatprep.subr.mxu0 0.0
  %1526 = vmatpush1.msra.mxu0 0.0
  %1527 = vmatprep.subr.mxu0 0.0
  %1528 = vmatpush1.msra.mxu0 0.0
  %1529 = vmatprep.subr.mxu0 0.0
  %1530 = vmatpush1.msra.mxu0 0.0
  %1531 = vmatprep.subr.mxu0 0.0
  %1532 = vmatpush1.msra.mxu0 0.0
  %1533 = vmatprep.subr.mxu0 0.0
  %1534 = vmatpush1.msra.mxu0 0.0
  %1535 = vmatprep.subr.mxu0 0.0
  %1536 = vmatpush1.msra.mxu0 0.0
  %1537 = vmatprep.subr.mxu0 0.0
  %1538 = vmatpush1.msra.mxu0 0.0
  %1539 = vmatprep.subr.mxu0 0.0
  %1540 = vmatpush1.msra.mxu0 0.0
  %1541 = vmatprep.subr.mxu0 0.0
  %1542 = vmatpush1.msra.mxu0 0.0
  %1543 = vmatprep.subr.mxu0 0.0
  %1544 = vmatpush1.msra.mxu0 0.0
  %1545 = vmatprep.subr.mxu0 0.0
  %1546 = vmatpush1.msra.mxu0 0.0
  %1547 = vmatprep.subr.mxu0 0.0
  %1548 = vmatpush1.msra.mxu0 0.0
  %1549 = vmatprep.subr.mxu0 0.0
  %1550 = vmatpush1.msra.mxu0 0.0
  %1551 = vmatprep.subr.mxu0 0.0
  %1552 = vmatpush1.msra.mxu0 0.0
  %1553 = vmatprep.subr.mxu0 0.0
  %1554 = vmatpush1.msra.mxu0 0.0
  %1555 = vmatprep.subr.mxu0 0.0
  %1556 = vmatpush1.msra.mxu0 0.0
  %1557 = vmatprep.subr.mxu0 0.0
  %1558 = vmatpush1.msra.mxu0 0.0
  %1559 = vmatprep.subr.mxu0 0.0
  %1560 = vmatpush1.msra.mxu0 0.0
  %1561 = vmatprep.subr.mxu0 0.0
  %1562 = vmatpush1.msra.mxu0 0.0
  %1563 = vmatprep.subr.mxu0 0.0
  %1564 = vmatpush1.msra.mxu0 0.0
  %1565 = vmatprep.subr.mxu0 0.0
  %1566 = vmatpush1.msra.mxu0 0.0
  %1567 = vmatprep.subr.mxu0 0.0
  %1568 = vmatpush1.msra.mxu0 0.0
  %1569 = vmatprep.subr.mxu0 0.0
  %1570 = vmatpush1.msra.mxu0 0.0
  %1571 = vmatprep.mubr.f32.mxu0 0.0
  %1572 = vmatmul.mubr.f32.gmra.mrb[0].mxu0 %v1505
  %v1573 = vpop.f32.mrb[0].mxu0
  %v1574 = vadd.f32 %v1501, %v1573
  %v1575 = vpop.f32.mrb[0].mxu0
  %1576 = vdwg.mxu0
  %1577 = vst [vmem:[%s3] sm:$0xff] %v1574
  %v1578 = vmul.f32 %v1574, 1.442695
  %v1579 = vpow.pop %v1578
  %1581 = vrot.lane.b32.xlu0 %v42, 32
  %v1582 = vpop.permute.xlu0 %1581
  %v1584 = vmul.f32 %v1579, %v1582
  %1586 = vrot.lane.b32.xlu0 %v1584, 96
  %v1587 = vpop.permute.xlu0 %1586
  %v1589 = vadd.f32 %v1574, %v1587
  %1591 = vrot.lane.b32.xlu0 %v1589, 64
  %v1592 = vpop.permute.xlu0 %1591
  %vm1594 = vcmask 785920
  %1595 = vst.msk [vmem:[%s3] sm:$0xff] %vm1594, %v1592
  // Predicated region
  $region14: #{bencoder_forward.1} parent=0 // pred_check
    _
  $region15: #{bencoder_forward.1} parent=0 // pred_check_branch
    %1597 = sbr.rel (0) target = $region17
  $region16: #{bencoder_forward.1} parent=0 // pred_region
    _
  $region17: #{bencoder_forward.1} parent=0 // pred_fallthru
    _
  // Predicated region
  $region18: #{bencoder_forward.1} parent=0 // pred_check
    _
  $region19: #{bencoder_forward.1} parent=0 // pred_check_branch
    %1599 = sbr.rel (0) target = $region21
  $region20: #{bencoder_forward.1} parent=0 // pred_region
    _
  $region21: #{bencoder_forward.1} parent=0 // pred_fallthru
    _

</llo_original>
